<compile_context>
chip_gen: v7x
topology: tpu7x:2x2x1
jax: 0.10.0
libtpu: 0.0.40
codegen_flags: <defaults>
</compile_context>

<pallas_src>
import numpy as np
import jax
import jax.numpy as jnp
from jax import lax
from jax.experimental import pallas as pl
from jax.experimental.pallas import tpu as pltpu

LN_EPS = 1e-5                      # torch.nn.LayerNorm default eps
MXU_DTYPE = jnp.bfloat16           # matmul-operand dtype (accumulation is always f32)
_INV_SQRT2 = np.float32(0.7071067811865476)


def _gelu_exact(x):
    # matches torch.nn.GELU() default (approximate='none'): 0.5*x*(1+erf(x/sqrt(2)))
    return 0.5 * x * (1.0 + lax.erf(x * _INV_SQRT2))


# ---------------------------------------------------------------------------
# Fused ProjectionHead kernel (both heads, batch-tiled)
#   projected = x @ W1 + b1
#   h         = GELU(projected)
#   h         = h @ W2 + b2
#   h         = dropout(h)        # identity at inference (deterministic)
#   h         = h + projected
#   out       = LayerNorm(h) * gamma + beta
# ---------------------------------------------------------------------------
def projection_pair_kernel(x_ref, w1_ref, b1_ref, w2_ref, b2_ref,
                           gamma_ref, beta_ref, o_ref):
    x = x_ref[...].astype(MXU_DTYPE)                                      # (TB, E)
    projected = jnp.dot(x, w1_ref[...],
                        preferred_element_type=jnp.float32) + b1_ref[...]  # (TB, P) f32
    h = _gelu_exact(projected)
    h = jnp.dot(h.astype(MXU_DTYPE), w2_ref[...],
                preferred_element_type=jnp.float32) + b2_ref[...]
    # TODO(synk): nn.Dropout(p=0.1) is stochastic in training mode; implemented as
    # inference-mode identity here (deterministic forward).
    h = h + projected
    mean = jnp.mean(h, axis=-1, keepdims=True)
    ctr = h - mean
    var = jnp.mean(ctr * ctr, axis=-1, keepdims=True)
    y = ctr * lax.rsqrt(var + LN_EPS)
    o_ref[...] = (y * gamma_ref[...] + beta_ref[...]).astype(o_ref.dtype)


def projection_head_pair(x_pair, w1, b1, w2, b2, gamma, beta, *, tb=256):
    """Run BOTH projection heads in one pallas_call.

    x_pair: (2, B, E) f32 (head 0 = image, head 1 = text).
    Weights stacked per head: w1 (2,E,P), b1 (2,1,P), w2 (2,P,P), b2/gamma/beta (2,1,P).
    Returns (2, B, P) f32 embeddings.
    """
    H, B, E = x_pair.shape
    P = w1.shape[-1]

    # Batch tile: multiple of 8 sublanes; pad B up so every tile is full.
    tb = min(tb, B)
    tb = -(-tb // 8) * 8
    Bp = -(-B // tb) * tb
    if Bp != B:
        x_pair = jnp.pad(x_pair, ((0, 0), (0, Bp - B), (0, 0)))
    nb = Bp // tb

    # bf16 weights: MXU fast path + half the HBM->VMEM weight traffic.
    w1 = w1.astype(MXU_DTYPE)
    w2 = w2.astype(MXU_DTYPE)

    head_const = lambda h, b: (h, 0, 0)    # weights resident across batch tiles
    batch_map = lambda h, b: (h, b, 0)

    # Explicit VMEM budget derived from the chosen tile sizes (double-buffered
    # activation tiles + double-buffered per-head weights), clamped well under
    # the v7x 64 MiB per-TC capacity.
    w_bytes = np.dtype(MXU_DTYPE).itemsize
    vmem_est = (2 * (tb * E * 4 + tb * P * 4)                  # x / out tiles (f32)
                + 2 * ((E * P + P * P) * w_bytes + 4 * P * 4))  # weights + 4 vectors
    vmem_limit = int(min(max(2 * vmem_est, 16 * 2 ** 20), 48 * 2 ** 20))

    out = pl.pallas_call(
        projection_pair_kernel,
        out_shape=jax.ShapeDtypeStruct((H, Bp, P), jnp.float32),
        grid=(H, nb),
        in_specs=[
            pl.BlockSpec((None, tb, E), batch_map),   # x tile
            pl.BlockSpec((None, E, P), head_const),   # W1 (pre-transposed [in, out])
            pl.BlockSpec((None, 1, P), head_const),   # b1
            pl.BlockSpec((None, P, P), head_const),   # W2 (pre-transposed [in, out])
            pl.BlockSpec((None, 1, P), head_const),   # b2
            pl.BlockSpec((None, 1, P), head_const),   # LayerNorm gamma
            pl.BlockSpec((None, 1, P), head_const),   # LayerNorm beta
        ],
        out_specs=pl.BlockSpec((None, tb, P), batch_map),
        compiler_params=pltpu.CompilerParams(
            dimension_semantics=("parallel", "parallel"),
            vmem_limit_bytes=vmem_limit),
    )(x_pair, w1, b1, w2, b2, gamma, beta)

    return out[:, :B, :] if Bp != B else out


# ---------------------------------------------------------------------------
# CLIP loss kernel
#   sim          = image_embeddings @ text_embeddings.T          [B, B]
#   caption_loss = -mean(diag(log_softmax(sim, dim=0)))
#   image_loss   = -mean(diag(log_softmax(sim, dim=1)))
#   loss         = (caption_loss + image_loss) / 2
# Both softmaxes are done along the lane axis: the dim=0 softmax of sim is the
# dim=-1 softmax of sim.T, which we get from a second cheap MXU contraction
# (txt, img) instead of a cross-sublane (axis=0) reduction or an explicit
# transpose through the XLU.
# ---------------------------------------------------------------------------
def clip_loss_kernel(emb_ref, o_ref):
    img = emb_ref[0].astype(MXU_DTYPE)     # (B, P)
    txt = emb_ref[1].astype(MXU_DTYPE)     # (B, P)
    dn = (((1,), (1,)), ((), ()))          # contract last dims: no materialized .T
    sim_it = lax.dot_general(img, txt, dn, preferred_element_type=jnp.float32)  # rows = images
    sim_ti = lax.dot_general(txt, img, dn, preferred_element_type=jnp.float32)  # rows = texts (= sim.T)

    B = sim_it.shape[0]
    rows = lax.broadcasted_iota(jnp.int32, (B, B), 0)
    cols = lax.broadcasted_iota(jnp.int32, (B, B), 1)
    eye = rows == cols

    def mean_row_nll(s):
        # -mean(diag(log_softmax(s, axis=-1))): only lane-axis (axis=-1) reductions.
        m = jnp.max(s, axis=-1, keepdims=True)
        lse = m + jnp.log(jnp.sum(jnp.exp(s - m), axis=-1, keepdims=True))
        diag = jnp.sum(jnp.where(eye, s, 0.0), axis=-1, keepdims=True)
        return jnp.sum(lse - diag) / B

    image_loss = mean_row_nll(sim_it)      # log_softmax(sim, dim=1)
    caption_loss = mean_row_nll(sim_ti)    # log_softmax(sim, dim=0)
    o_ref[0, 0] = (caption_loss + image_loss) * 0.5


def clip_loss(emb_pair):
    """emb_pair: (2, B, P) f32 stacked [image_embeddings, text_embeddings]."""
    out = pl.pallas_call(
        clip_loss_kernel,
        out_shape=jax.ShapeDtypeStruct((1, 1), jnp.float32),
        in_specs=[pl.BlockSpec(memory_space=pltpu.VMEM)],
        out_specs=pl.BlockSpec(memory_space=pltpu.SMEM),   # scalar result -> SMEM
    )(emb_pair)
    return out[0, 0]


# ---------------------------------------------------------------------------
# Parameter construction + full forward (glue in plain JAX)
# ---------------------------------------------------------------------------
def init_projection_params(key, embedding_dim, projection_dim):
    k1, k2, k3, k4 = jax.random.split(key, 4)
    return dict(
        w1=(0.02 * jax.random.normal(k1, (embedding_dim, projection_dim))).astype(jnp.float32),
        b1=(0.02 * jax.random.normal(k2, (1, projection_dim))).astype(jnp.float32),
        w2=(0.02 * jax.random.normal(k3, (projection_dim, projection_dim))).astype(jnp.float32),
        b2=(0.02 * jax.random.normal(k4, (1, projection_dim))).astype(jnp.float32),
        gamma=jnp.ones((1, projection_dim), jnp.float32),
        beta=jnp.zeros((1, projection_dim), jnp.float32),
    )


def stack_projection_params(img_params, txt_params):
    """Pre-stack the two heads' params along a leading head axis (done once)."""
    return {k: jnp.stack([img_params[k], txt_params[k]], axis=0) for k in img_params}


def clip_forward(image_features, text_features, stacked_params, *, tb=256):
    # TODO(synk): timm ViT image encoder and BERT text encoder are external pretrained
    # models; image_features / text_features stand in for their pooled outputs.
    assert image_features.shape[1] == text_features.shape[1], (
        "fused head path requires image_embedding == text_embedding (768 == 768 here)")
    x_pair = jnp.stack([image_features, text_features], axis=0)          # (2, B, E)
    p = stacked_params
    emb = projection_head_pair(x_pair, p["w1"], p["b1"], p["w2"],
                               p["b2"], p["gamma"], p["beta"], tb=tb)
    return clip_loss(emb)


# ---------------------------------------------------------------------------
# Pure-JAX reference (same bf16-operand / f32-accumulate mixed precision) for sanity.
# ---------------------------------------------------------------------------
def _ref_projection_head(x, p):
    projected = jnp.dot(x.astype(MXU_DTYPE), p["w1"].astype(MXU_DTYPE),
                        preferred_element_type=jnp.float32) + p["b1"]
    h = jax.nn.gelu(projected, approximate=False)
    h = jnp.dot(h.astype(MXU_DTYPE), p["w2"].astype(MXU_DTYPE),
                preferred_element_type=jnp.float32) + p["b2"]
    h = h + projected
    mean = jnp.mean(h, axis=-1, keepdims=True)
    var = jnp.mean((h - mean) ** 2, axis=-1, keepdims=True)
    return (h - mean) / jnp.sqrt(var + LN_EPS) * p["gamma"] + p["beta"]


def _ref_forward(image_features, text_features, img_params, txt_params):
    ie = _ref_projection_head(image_features, img_params)
    te = _ref_projection_head(text_features, txt_params)
    sim = jnp.dot(ie.astype(MXU_DTYPE), te.astype(MXU_DTYPE).T,
                  preferred_element_type=jnp.float32)
    ls0 = jax.nn.log_softmax(sim, axis=0)
    ls1 = jax.nn.log_softmax(sim, axis=1)
    caption_loss = -jnp.mean(jnp.diag(ls0))
    image_loss = -jnp.mean(jnp.diag(ls1))
    return (caption_loss + image_loss) / 2.0


if __name__ == "__main__":
    # Shapes implied by the module config: batch_size=32, image/text_embedding=768,
    # projection_dim=512 (lane-dense).  tb=16 exercises the batch-tiled grid (2x2).
    B, IMG_E, TXT_E, PROJ = 32, 768, 768, 512

    key = jax.random.PRNGKey(0)
    k_img, k_txt, k_ip, k_tp = jax.random.split(key, 4)

    image_features = jax.random.normal(k_img, (B, IMG_E), jnp.float32)
    text_features = jax.random.normal(k_txt, (B, TXT_E), jnp.float32)
    img_params = init_projection_params(k_ip, IMG_E, PROJ)
    txt_params = init_projection_params(k_tp, TXT_E, PROJ)
    stacked = stack_projection_params(img_params, txt_params)

    loss = clip_forward(image_features, text_features, stacked, tb=16)
    loss = jax.block_until_ready(loss)

    ref = _ref_forward(image_features, text_features, img_params, txt_params)
    # Tolerance covers bf16 rounding-boundary flips between the Pallas and XLA paths;
    # any structural bug would move the ~log(B)-scale loss far more than 1e-2.
    np.testing.assert_allclose(np.asarray(loss), np.asarray(ref), rtol=1e-2, atol=1e-2)

    print("KERNEL_OK")
</pallas_src>

<mosaic_0001>
module attributes {stable_mosaic.version = 11 : i64} {
  func.func @projection_pair_kernel(%arg0: i32, %arg1: i32, %arg2: memref<1x16x768xf32, #tpu.memory_space<vmem>>, %arg3: memref<1x768x512xbf16, #tpu.memory_space<vmem>>, %arg4: memref<1x1x512xf32, #tpu.memory_space<vmem>>, %arg5: memref<1x512x512xbf16, #tpu.memory_space<vmem>>, %arg6: memref<1x1x512xf32, #tpu.memory_space<vmem>>, %arg7: memref<1x1x512xf32, #tpu.memory_space<vmem>>, %arg8: memref<1x1x512xf32, #tpu.memory_space<vmem>>, %arg9: memref<1x16x512xf32, #tpu.memory_space<vmem>>) attributes {dimension_semantics = [#tpu.dimension_semantics<parallel>, #tpu.dimension_semantics<parallel>], iteration_bounds = array<i64: 2, 2>, scalar_prefetch = 0 : i64, scratch_operands = 0 : i64, tpu.core_type = #tpu.core_type<tc>, window_params = [{transform_indices = @transform_0, window_bounds = array<i64: 1, 16, 768>}, {transform_indices = @transform_1, window_bounds = array<i64: 1, 768, 512>}, {transform_indices = @transform_2, window_bounds = array<i64: 1, 1, 512>}, {transform_indices = @transform_3, window_bounds = array<i64: 1, 512, 512>}, {transform_indices = @transform_4, window_bounds = array<i64: 1, 1, 512>}, {transform_indices = @transform_5, window_bounds = array<i64: 1, 1, 512>}, {transform_indices = @transform_6, window_bounds = array<i64: 1, 1, 512>}, {transform_indices = @transform_7, window_bounds = array<i64: 1, 16, 512>}]} {
    %c0 = arith.constant 0 : index
    %c0_0 = arith.constant 0 : index
    %c0_1 = arith.constant 0 : index
    %0 = vector.load %arg2[%c0, %c0_0, %c0_1] : memref<1x16x768xf32, #tpu.memory_space<vmem>>, vector<1x16x768xf32>
    %1 = vector.shape_cast %0 : vector<1x16x768xf32> to vector<16x768xf32>
    %2 = arith.truncf %1 : vector<16x768xf32> to vector<16x768xbf16>
    %c0_2 = arith.constant 0 : index
    %c0_3 = arith.constant 0 : index
    %c0_4 = arith.constant 0 : index
    %3 = vector.load %arg3[%c0_2, %c0_3, %c0_4] : memref<1x768x512xbf16, #tpu.memory_space<vmem>>, vector<1x768x512xbf16>
    %4 = vector.shape_cast %3 : vector<1x768x512xbf16> to vector<768x512xbf16>
    %cst = arith.constant dense<0.000000e+00> : vector<16x512xf32>
    %5 = tpu.matmul %2, %4, %cst {dimension_numbers = #tpu.dot_dimension_numbers<[1], [0], [0], [1], [0, 0, 1, 1], [], []>} : vector<16x768xbf16>, vector<768x512xbf16>, vector<16x512xf32> -> vector<16x512xf32>
    %c0_5 = arith.constant 0 : index
    %c0_6 = arith.constant 0 : index
    %c0_7 = arith.constant 0 : index
    %6 = vector.load %arg4[%c0_5, %c0_6, %c0_7] : memref<1x1x512xf32, #tpu.memory_space<vmem>>, vector<1x1x512xf32>
    %7 = vector.shape_cast %6 : vector<1x1x512xf32> to vector<1x512xf32>
    %8 = vector.broadcast %7 : vector<1x512xf32> to vector<16x512xf32>
    %9 = arith.addf %5, %8 : vector<16x512xf32>
    %cst_8 = arith.constant 5.000000e-01 : f32
    %10 = vector.broadcast %cst_8 : f32 to vector<16x512xf32>
    %11 = arith.mulf %10, %9 : vector<16x512xf32>
    %cst_9 = arith.constant 0.707106769 : f32
    %12 = vector.broadcast %cst_9 : f32 to vector<16x512xf32>
    %13 = arith.mulf %9, %12 : vector<16x512xf32>
    %14 = math.erf %13 : vector<16x512xf32>
    %cst_10 = arith.constant 1.000000e+00 : f32
    %15 = vector.broadcast %cst_10 : f32 to vector<16x512xf32>
    %16 = arith.addf %15, %14 : vector<16x512xf32>
    %17 = arith.mulf %11, %16 : vector<16x512xf32>
    %18 = arith.truncf %17 : vector<16x512xf32> to vector<16x512xbf16>
    %c0_11 = arith.constant 0 : index
    %c0_12 = arith.constant 0 : index
    %c0_13 = arith.constant 0 : index
    %19 = vector.load %arg5[%c0_11, %c0_12, %c0_13] : memref<1x512x512xbf16, #tpu.memory_space<vmem>>, vector<1x512x512xbf16>
    %20 = vector.shape_cast %19 : vector<1x512x512xbf16> to vector<512x512xbf16>
    %cst_14 = arith.constant dense<0.000000e+00> : vector<16x512xf32>
    %21 = tpu.matmul %18, %20, %cst_14 {dimension_numbers = #tpu.dot_dimension_numbers<[1], [0], [0], [1], [0, 0, 1, 1], [], []>} : vector<16x512xbf16>, vector<512x512xbf16>, vector<16x512xf32> -> vector<16x512xf32>
    %c0_15 = arith.constant 0 : index
    %c0_16 = arith.constant 0 : index
    %c0_17 = arith.constant 0 : index
    %22 = vector.load %arg6[%c0_15, %c0_16, %c0_17] : memref<1x1x512xf32, #tpu.memory_space<vmem>>, vector<1x1x512xf32>
    %23 = vector.shape_cast %22 : vector<1x1x512xf32> to vector<1x512xf32>
    %24 = vector.broadcast %23 : vector<1x512xf32> to vector<16x512xf32>
    %25 = arith.addf %21, %24 : vector<16x512xf32>
    %26 = arith.addf %25, %9 : vector<16x512xf32>
    %cst_18 = arith.constant dense<0.000000e+00> : vector<16xf32>
    %27 = vector.multi_reduction <add>, %26, %cst_18 [1] : vector<16x512xf32> to vector<16xf32>
    %28 = vector.shape_cast %27 : vector<16xf32> to vector<16x1xf32>
    %cst_19 = arith.constant 5.120000e+02 : f32
    %29 = vector.broadcast %cst_19 : f32 to vector<16x1xf32>
    %30 = arith.divf %28, %29 : vector<16x1xf32>
    %31 = vector.broadcast %30 : vector<16x1xf32> to vector<16x512xf32>
    %32 = arith.subf %26, %31 : vector<16x512xf32>
    %33 = arith.mulf %32, %32 : vector<16x512xf32>
    %cst_20 = arith.constant dense<0.000000e+00> : vector<16xf32>
    %34 = vector.multi_reduction <add>, %33, %cst_20 [1] : vector<16x512xf32> to vector<16xf32>
    %35 = vector.shape_cast %34 : vector<16xf32> to vector<16x1xf32>
    %cst_21 = arith.constant 5.120000e+02 : f32
    %36 = vector.broadcast %cst_21 : f32 to vector<16x1xf32>
    %37 = arith.divf %35, %36 : vector<16x1xf32>
    %cst_22 = arith.constant 9.99999974E-6 : f32
    %38 = vector.broadcast %cst_22 : f32 to vector<16x1xf32>
    %39 = arith.addf %37, %38 : vector<16x1xf32>
    %40 = math.rsqrt %39 : vector<16x1xf32>
    %41 = vector.broadcast %40 : vector<16x1xf32> to vector<16x512xf32>
    %42 = arith.mulf %32, %41 : vector<16x512xf32>
    %c0_23 = arith.constant 0 : index
    %c0_24 = arith.constant 0 : index
    %c0_25 = arith.constant 0 : index
    %43 = vector.load %arg7[%c0_23, %c0_24, %c0_25] : memref<1x1x512xf32, #tpu.memory_space<vmem>>, vector<1x1x512xf32>
    %44 = vector.shape_cast %43 : vector<1x1x512xf32> to vector<1x512xf32>
    %45 = vector.broadcast %44 : vector<1x512xf32> to vector<16x512xf32>
    %46 = arith.mulf %42, %45 : vector<16x512xf32>
    %c0_26 = arith.constant 0 : index
    %c0_27 = arith.constant 0 : index
    %c0_28 = arith.constant 0 : index
    %47 = vector.load %arg8[%c0_26, %c0_27, %c0_28] : memref<1x1x512xf32, #tpu.memory_space<vmem>>, vector<1x1x512xf32>
    %48 = vector.shape_cast %47 : vector<1x1x512xf32> to vector<1x512xf32>
    %49 = vector.broadcast %48 : vector<1x512xf32> to vector<16x512xf32>
    %50 = arith.addf %46, %49 : vector<16x512xf32>
    %c0_29 = arith.constant 0 : index
    %c0_30 = arith.constant 0 : index
    %c0_31 = arith.constant 0 : index
    %51 = vector.load %arg9[%c0_29, %c0_30, %c0_31] : memref<1x16x512xf32, #tpu.memory_space<vmem>>, vector<1x16x512xf32>
    %52 = vector.shape_cast %51 : vector<1x16x512xf32> to vector<16x512xf32>
    %53 = vector.shape_cast %50 : vector<16x512xf32> to vector<1x16x512xf32>
    tpu.vector_store %arg9[%c0_29, %c0_30, %c0_31], %53 {strides = array<i32>} : memref<1x16x512xf32, #tpu.memory_space<vmem>>, vector<1x16x512xf32>,
    return
  }
  func.func @transform_0(%arg0: i32, %arg1: i32) -> (i32, i32, i32) {
    %c0_i32 = arith.constant 0 : i32
    %c0_i32_0 = arith.constant 0 : i32
    return %arg0, %arg1, %c0_i32 : i32, i32, i32
  }
  func.func @transform_1(%arg0: i32, %arg1: i32) -> (i32, i32, i32) {
    %c0_i32 = arith.constant 0 : i32
    %c0_i32_0 = arith.constant 0 : i32
    %c0_i32_1 = arith.constant 0 : i32
    return %arg0, %c0_i32, %c0_i32_0 : i32, i32, i32
  }
  func.func @transform_2(%arg0: i32, %arg1: i32) -> (i32, i32, i32) {
    %c0_i32 = arith.constant 0 : i32
    %c0_i32_0 = arith.constant 0 : i32
    %c0_i32_1 = arith.constant 0 : i32
    return %arg0, %c0_i32, %c0_i32_0 : i32, i32, i32
  }
  func.func @transform_3(%arg0: i32, %arg1: i32) -> (i32, i32, i32) {
    %c0_i32 = arith.constant 0 : i32
    %c0_i32_0 = arith.constant 0 : i32
    %c0_i32_1 = arith.constant 0 : i32
    return %arg0, %c0_i32, %c0_i32_0 : i32, i32, i32
  }
  func.func @transform_4(%arg0: i32, %arg1: i32) -> (i32, i32, i32) {
    %c0_i32 = arith.constant 0 : i32
    %c0_i32_0 = arith.constant 0 : i32
    %c0_i32_1 = arith.constant 0 : i32
    return %arg0, %c0_i32, %c0_i32_0 : i32, i32, i32
  }
  func.func @transform_5(%arg0: i32, %arg1: i32) -> (i32, i32, i32) {
    %c0_i32 = arith.constant 0 : i32
    %c0_i32_0 = arith.constant 0 : i32
    %c0_i32_1 = arith.constant 0 : i32
    return %arg0, %c0_i32, %c0_i32_0 : i32, i32, i32
  }
  func.func @transform_6(%arg0: i32, %arg1: i32) -> (i32, i32, i32) {
    %c0_i32 = arith.constant 0 : i32
    %c0_i32_0 = arith.constant 0 : i32
    %c0_i32_1 = arith.constant 0 : i32
    return %arg0, %c0_i32, %c0_i32_0 : i32, i32, i32
  }
  func.func @transform_7(%arg0: i32, %arg1: i32) -> (i32, i32, i32) {
    %c0_i32 = arith.constant 0 : i32
    %c0_i32_0 = arith.constant 0 : i32
    return %arg0, %arg1, %c0_i32 : i32, i32, i32
  }
}

</mosaic_0001>

<llo_original>
// kernel: tpu_custom_call.1
$region0: #{tpu_custom_call.1}
  #allocation0 [shape = 'u32[]', space=smem, size = 0x4, offset = 0x4, fixed_abs, tag = 'smem constant byte address 0x4 - core index']
  #allocation1 [shape = 'u32[144,128]{1,0:T(1,128)}', space=vmem, size = 0x12000, scoped, tag = 'internal scratch']
  %s0 = inlined_call_operand.hbm [shape: f32[2,32,768], index: 0, kind: input, shape index: {}]
  %s1 = inlined_call_operand.hbm [shape: bf16[2,768,512], index: 1, kind: input, shape index: {}]
  %s2 = inlined_call_operand.hbm [shape: f32[2,1,512], index: 2, kind: input, shape index: {}]
  %s3 = inlined_call_operand.hbm [shape: bf16[2,512,512], index: 3, kind: input, shape index: {}]
  %s4 = inlined_call_operand.hbm [shape: f32[2,1,512], index: 4, kind: input, shape index: {}]
  %s5 = inlined_call_operand.hbm [shape: f32[2,1,512], index: 5, kind: input, shape index: {}]
  %s6 = inlined_call_operand.hbm [shape: f32[2,1,512], index: 6, kind: input, shape index: {}]
  %s7 = inlined_call_operand.hbm [shape: f32[2,32,512], index: 7, kind: output, shape index: {}]
  %s8 = sld [smem:[#allocation0]]
  $region89: #{tpu_custom_call.1} parent=0
    _
  %s10 = ssub.s32 1, %s8
  %s11 = scalar_select 0, %s10, %s8
  $region1: #{tpu_custom_call.1} parent=0
    #allocation2 [shape = 'u8[98304]{0}', space=vmem, size = 0x18000, scoped, tag = 'input window, operand 0']
    #allocation3 [shape = 's32[2]{0}', space=sflag, size = 0x8, scoped, tag = 'scoped memory for tpu_custom_call.1']
    #allocation4 [shape = 's32[2]{0}', space=sflag, size = 0x8, scoped, tag = 'scoped memory for tpu_custom_call.1']
    #allocation5 [shape = 'u8[1572864]{0}', space=vmem, size = 0x180000, scoped, tag = 'input window, operand 1']
    #allocation6 [shape = 's32[2]{0}', space=sflag, size = 0x8, scoped, tag = 'scoped memory for tpu_custom_call.1']
    #allocation7 [shape = 'u8[4096]{0}', space=vmem, size = 0x1000, scoped, tag = 'input window, operand 2']
    #allocation8 [shape = 'u8[1048576]{0}', space=vmem, size = 0x100000, scoped, tag = 'input window, operand 3']
    #allocation9 [shape = 's32[2]{0}', space=sflag, size = 0x8, scoped, tag = 'scoped memory for tpu_custom_call.1']
    #allocation10 [shape = 'u8[4096]{0}', space=vmem, size = 0x1000, scoped, tag = 'input window, operand 4']
    #allocation11 [shape = 'u8[4096]{0}', space=vmem, size = 0x1000, scoped, tag = 'input window, operand 5']
    #allocation12 [shape = 's32[2]{0}', space=sflag, size = 0x8, scoped, tag = 'scoped memory for tpu_custom_call.1']
    #allocation13 [shape = 'u8[4096]{0}', space=vmem, size = 0x1000, scoped, tag = 'input window, operand 6']
    #allocation14 [shape = 'u8[65536]{0}', space=vmem, size = 0x10000, scoped, tag = 'output window, operand 0']
    %12 = vsyncpa [#allocation3], 0
    %s13 = scalar_lea.sflag [#allocation3], 1
    %14 = vsyncpa %s13, 0
    %15 = vsyncpa [#allocation6], 0
    %s16 = scalar_lea.sflag [#allocation6], 1
    %17 = vsyncpa %s16, 0
    %18 = vsyncpa [#allocation9], 0
    %s19 = scalar_lea.sflag [#allocation9], 1
    %20 = vsyncpa %s19, 0
    %21 = vsyncpa [#allocation12], 0
    %s22 = scalar_lea.sflag [#allocation12], 1
    %23 = vsyncpa %s22, 0
    %24 = vsyncpa [#allocation4], 0
    %s25 = scalar_lea.sflag [#allocation4], 1
    %26 = vsyncpa %s25, 0
    loop: start=0, step=1, limit=6
    $region2: #{tpu_custom_call.1} parent=1 // loop_pre_header
      _
    $region3: #{tpu_custom_call.1} parent=1 // loop_header
      %s28 = sphi 0, %s32
      %p29 = scmp.ge.s32.totalorder %s28, 6
      %s35 = sphi 0, %s47
      %s36 = sphi 0, %s43
      %s37 = sphi 0, %s35
      %s38 = sphi 0, %s36
      %s39 = sphi 0, %s37
      %s40 = sphi 0, %s38
      %s52 = sphi 0, %s54
      %s55 = sphi 0, %s52
      %s56 = sphi 0, %s55
      %s72 = sphi 0, %s56
      %s78 = sphi 0, %s80
      %s81 = sphi 0, %s78
      %s82 = sphi 0, %s81
      %s98 = sphi 0, %s82
      %s104 = sphi 0, %s106
      %s107 = sphi 0, %s104
      %s108 = sphi 0, %s107
      %s124 = sphi 0, %s108
      %s130 = sphi 0, %s132
      %s133 = sphi 0, %s130
      %s134 = sphi 0, %s133
      %s150 = sphi 0, %s134
      %s156 = sphi 0, %s158
      %s159 = sphi 0, %s156
      %s160 = sphi 0, %s159
      %s176 = sphi 0, %s160
      %s182 = sphi 0, %s184
      %s185 = sphi 0, %s182
      %s186 = sphi 0, %s185
      %s202 = sphi 0, %s186
      %s208 = sphi 0, %s210
      %s211 = sphi 0, %s208
      %s212 = sphi 0, %s211
      %s228 = sphi 0, %s212
      %s236 = sphi 0, %s238
      %s239 = sphi 0, %s236
      %s240 = sphi 0, %s239
      %s256 = sphi 0, %s240
    $region4: #{tpu_custom_call.1} parent=1 // loop_header_branch
      %31 = sbr.rel (%p29) target = $region8
    $region5: #{tpu_custom_call.1} parent=1 // loop_body
      %s33 = ssub.s32 %s28, 1
      %s34 = ssub.s32 %s28, 2
      %s41 = sadd.s32 1, %s36
      %p42 = scmp.ge.s32.totalorder %s41, 2
      %s43 = scalar_select %p42, 0, %s41
      %s44 = sadd.s32 1, %s35
      %s45 = scalar_select %p42, %s44, %s35
      %p46 = scmp.ge.s32.totalorder %s45, 2
      %s47 = scalar_select %p46, 0, %s45
      %s48 = ssub.s32 %s35, %s47
      %s49 = ssub.s32 %s36, %s43
      %s50 = sor.u32 %s48, %s49
      %p51 = scmp.eq.s32.totalorder %s50, 0
      %s53 = sadd.s32 %s52, 1
      %s54 = scalar_select %p51, %s52, %s53
      %p57 = pneg %p51
      %p58 = scmp.eq.s32.totalorder %s28, 3
      %p59 = por %p57, %p58
      %p60 = scmp.ne.s32.totalorder %s52, %s55
      %p61 = scmp.eq.s32.totalorder %s28, 0
      %p62 = por %p60, %p61
      %p63 = scmp.ne.s32.totalorder %s52, %s55
      %p64 = scmp.eq.s32.totalorder %s33, 3
      %p65 = por %p63, %p64
      %p66 = scmp.ne.s32.totalorder %s55, %s56
      %p67 = scmp.eq.s32.totalorder %s33, 0
      %p68 = por %p66, %p67
      %p69 = scmp.ne.s32.totalorder %s55, %s56
      %p70 = scmp.eq.s32.totalorder %s34, 3
      %p71 = por %p69, %p70
      %p73 = scmp.ne.s32.totalorder %s56, %s72
      %p74 = scmp.eq.s32.totalorder %s34, 0
      %p75 = por %p73, %p74
      %s76 = ssub.s32 %s35, %s47
      %p77 = scmp.eq.s32.totalorder %s76, 0
      %s79 = sadd.s32 %s78, 1
      %s80 = scalar_select %p77, %s78, %s79
      %p83 = pneg %p77
      %p84 = scmp.eq.s32.totalorder %s28, 3
      %p85 = por %p83, %p84
      %p86 = scmp.ne.s32.totalorder %s78, %s81
      %p87 = scmp.eq.s32.totalorder %s28, 0
      %p88 = por %p86, %p87
      %p89 = scmp.ne.s32.totalorder %s78, %s81
      %p90 = scmp.eq.s32.totalorder %s33, 3
      %p91 = por %p89, %p90
      %p92 = scmp.ne.s32.totalorder %s81, %s82
      %p93 = scmp.eq.s32.totalorder %s33, 0
      %p94 = por %p92, %p93
      %p95 = scmp.ne.s32.totalorder %s81, %s82
      %p96 = scmp.eq.s32.totalorder %s34, 3
      %p97 = por %p95, %p96
      %p99 = scmp.ne.s32.totalorder %s82, %s98
      %p100 = scmp.eq.s32.totalorder %s34, 0
      %p101 = por %p99, %p100
      %s102 = ssub.s32 %s35, %s47
      %p103 = scmp.eq.s32.totalorder %s102, 0
      %s105 = sadd.s32 %s104, 1
      %s106 = scalar_select %p103, %s104, %s105
      %p109 = pneg %p103
      %p110 = scmp.eq.s32.totalorder %s28, 3
      %p111 = por %p109, %p110
      %p112 = scmp.ne.s32.totalorder %s104, %s107
      %p113 = scmp.eq.s32.totalorder %s28, 0
      %p114 = por %p112, %p113
      %p115 = scmp.ne.s32.totalorder %s104, %s107
      %p116 = scmp.eq.s32.totalorder %s33, 3
      %p117 = por %p115, %p116
      %p118 = scmp.ne.s32.totalorder %s107, %s108
      %p119 = scmp.eq.s32.totalorder %s33, 0
      %p120 = por %p118, %p119
      %p121 = scmp.ne.s32.totalorder %s107, %s108
      %p122 = scmp.eq.s32.totalorder %s34, 3
      %p123 = por %p121, %p122
      %p125 = scmp.ne.s32.totalorder %s108, %s124
      %p126 = scmp.eq.s32.totalorder %s34, 0
      %p127 = por %p125, %p126
      %s128 = ssub.s32 %s35, %s47
      %p129 = scmp.eq.s32.totalorder %s128, 0
      %s131 = sadd.s32 %s130, 1
      %s132 = scalar_select %p129, %s130, %s131
      %p135 = pneg %p129
      %p136 = scmp.eq.s32.totalorder %s28, 3
      %p137 = por %p135, %p136
      %p138 = scmp.ne.s32.totalorder %s130, %s133
      %p139 = scmp.eq.s32.totalorder %s28, 0
      %p140 = por %p138, %p139
      %p141 = scmp.ne.s32.totalorder %s130, %s133
      %p142 = scmp.eq.s32.totalorder %s33, 3
      %p143 = por %p141, %p142
      %p144 = scmp.ne.s32.totalorder %s133, %s134
      %p145 = scmp.eq.s32.totalorder %s33, 0
      %p146 = por %p144, %p145
      %p147 = scmp.ne.s32.totalorder %s133, %s134
      %p148 = scmp.eq.s32.totalorder %s34, 3
      %p149 = por %p147, %p148
      %p151 = scmp.ne.s32.totalorder %s134, %s150
      %p152 = scmp.eq.s32.totalorder %s34, 0
      %p153 = por %p151, %p152
      %s154 = ssub.s32 %s35, %s47
      %p155 = scmp.eq.s32.totalorder %s154, 0
      %s157 = sadd.s32 %s156, 1
      %s158 = scalar_select %p155, %s156, %s157
      %p161 = pneg %p155
      %p162 = scmp.eq.s32.totalorder %s28, 3
      %p163 = por %p161, %p162
      %p164 = scmp.ne.s32.totalorder %s156, %s159
      %p165 = scmp.eq.s32.totalorder %s28, 0
      %p166 = por %p164, %p165
      %p167 = scmp.ne.s32.totalorder %s156, %s159
      %p168 = scmp.eq.s32.totalorder %s33, 3
      %p169 = por %p167, %p168
      %p170 = scmp.ne.s32.totalorder %s159, %s160
      %p171 = scmp.eq.s32.totalorder %s33, 0
      %p172 = por %p170, %p171
      %p173 = scmp.ne.s32.totalorder %s159, %s160
      %p174 = scmp.eq.s32.totalorder %s34, 3
      %p175 = por %p173, %p174
      %p177 = scmp.ne.s32.totalorder %s160, %s176
      %p178 = scmp.eq.s32.totalorder %s34, 0
      %p179 = por %p177, %p178
      %s180 = ssub.s32 %s35, %s47
      %p181 = scmp.eq.s32.totalorder %s180, 0
      %s183 = sadd.s32 %s182, 1
      %s184 = scalar_select %p181, %s182, %s183
      %p187 = pneg %p181
      %p188 = scmp.eq.s32.totalorder %s28, 3
      %p189 = por %p187, %p188
      %p190 = scmp.ne.s32.totalorder %s182, %s185
      %p191 = scmp.eq.s32.totalorder %s28, 0
      %p192 = por %p190, %p191
      %p193 = scmp.ne.s32.totalorder %s182, %s185
      %p194 = scmp.eq.s32.totalorder %s33, 3
      %p195 = por %p193, %p194
      %p196 = scmp.ne.s32.totalorder %s185, %s186
      %p197 = scmp.eq.s32.totalorder %s33, 0
      %p198 = por %p196, %p197
      %p199 = scmp.ne.s32.totalorder %s185, %s186
      %p200 = scmp.eq.s32.totalorder %s34, 3
      %p201 = por %p199, %p200
      %p203 = scmp.ne.s32.totalorder %s186, %s202
      %p204 = scmp.eq.s32.totalorder %s34, 0
      %p205 = por %p203, %p204
      %s206 = ssub.s32 %s35, %s47
      %p207 = scmp.eq.s32.totalorder %s206, 0
      %s209 = sadd.s32 %s208, 1
      %s210 = scalar_select %p207, %s208, %s209
      %p213 = pneg %p207
      %p214 = scmp.eq.s32.totalorder %s28, 3
      %p215 = por %p213, %p214
      %p216 = scmp.ne.s32.totalorder %s208, %s211
      %p217 = scmp.eq.s32.totalorder %s28, 0
      %p218 = por %p216, %p217
      %p219 = scmp.ne.s32.totalorder %s208, %s211
      %p220 = scmp.eq.s32.totalorder %s33, 3
      %p221 = por %p219, %p220
      %p222 = scmp.ne.s32.totalorder %s211, %s212
      %p223 = scmp.eq.s32.totalorder %s33, 0
      %p224 = por %p222, %p223
      %p225 = scmp.ne.s32.totalorder %s211, %s212
      %p226 = scmp.eq.s32.totalorder %s34, 3
      %p227 = por %p225, %p226
      %p229 = scmp.ne.s32.totalorder %s212, %s228
      %p230 = scmp.eq.s32.totalorder %s34, 0
      %p231 = por %p229, %p230
      %s232 = ssub.s32 %s35, %s47
      %s233 = ssub.s32 %s36, %s43
      %s234 = sor.u32 %s232, %s233
      %p235 = scmp.eq.s32.totalorder %s234, 0
      %s237 = sadd.s32 %s236, 1
      %s238 = scalar_select %p235, %s236, %s237
      %p241 = pneg %p235
      %p242 = scmp.eq.s32.totalorder %s28, 3
      %p243 = por %p241, %p242
      %p244 = scmp.ne.s32.totalorder %s236, %s239
      %p245 = scmp.eq.s32.totalorder %s28, 0
      %p246 = por %p244, %p245
      %p247 = scmp.ne.s32.totalorder %s236, %s239
      %p248 = scmp.eq.s32.totalorder %s33, 3
      %p249 = por %p247, %p248
      %p250 = scmp.ne.s32.totalorder %s239, %s240
      %p251 = scmp.eq.s32.totalorder %s33, 0
      %p252 = por %p250, %p251
      %p253 = scmp.ne.s32.totalorder %s239, %s240
      %p254 = scmp.eq.s32.totalorder %s34, 3
      %p255 = por %p253, %p254
      %p257 = scmp.ne.s32.totalorder %s240, %s256
      %p258 = scmp.eq.s32.totalorder %s34, 0
      %p259 = por %p257, %p258
      %p260 = scmp.le.s32.totalorder 1, %s28
      %p261 = scmp.lt.s32.totalorder %s28, 5
      %p262 = pnand %p260, %p261
      %p263 = pneg %p262
      // Predicated region
      $region9: #{tpu_custom_call.1} parent=5 // pred_check
        _
      $region10: #{tpu_custom_call.1} parent=5 // pred_check_branch
        %265 = sbr.rel (%p262) target = $region12
      $region11: #{tpu_custom_call.1} parent=5 // pred_region
        %s266 = ssub.s32 %s28, 1
      $region12: #{tpu_custom_call.1} parent=5 // pred_fallthru
        _
      %p267 = scmp.lt.s32.totalorder %s28, 4
      // Predicated region
      $region13: #{tpu_custom_call.1} parent=5 // pred_check
        %p268 = pneg %p267
      $region14: #{tpu_custom_call.1} parent=5 // pred_check_branch
        %270 = sbr.rel (%p268) target = $region16
      $region15: #{tpu_custom_call.1} parent=5 // pred_region
        // Predicated region
        $region17: #{tpu_custom_call.1} parent=15 // pred_check
          %p271 = pneg %p62
        $region18: #{tpu_custom_call.1} parent=15 // pred_check_branch
          %273 = sbr.rel (%p271) target = $region20
        $region19: #{tpu_custom_call.1} parent=15 // pred_region
          %s274 = sand.u32 %s52, 1
          %s275 = scalar_lea.sflag [#allocation3], %s274
          %s276 = sand.u32 %s52, 1
          %s277 = smul.addr %s276, 96
          %s278 = scalar_lea.vmem [#allocation2], %s277
          %s279 = smul.u32 2, %s36
          %s281 = ssub.s32 1536, 1536
          %282 = vsyncadd %s275, %s281
          %s283 = smul.addr %s279, 6
          %s284 = smul.addr %s35, 24
          %s285 = sadd.s32 %s283, %s284
          %s286 = smul.addr %s285, 128
          %s287 = scalar_lea.hbm %s0, %s286
          %s288 = sshll.u32 %s278, 4
          %s289 = int_to_ptr.vmem [resolvable:$true] %s288
          %294 = dma.hbm_to_vmem [thread:$0]  %s287, 1536, %s289, %s275, 768, 768, 48
        $region20: #{tpu_custom_call.1} parent=15 // pred_fallthru
          _
        // Predicated region
        $region21: #{tpu_custom_call.1} parent=15 // pred_check
          %p295 = pneg %p88
        $region22: #{tpu_custom_call.1} parent=15 // pred_check_branch
          %297 = sbr.rel (%p295) target = $region24
        $region23: #{tpu_custom_call.1} parent=15 // pred_region
          %s298 = sand.u32 %s28, 1
          %s299 = scalar_lea.sflag [#allocation6], %s298
          %s300 = sand.u32 %s78, 1
          %s301 = smul.addr %s300, 1536
          %s302 = scalar_lea.vmem [#allocation5], %s301
          %s304 = ssub.s32 24576, 24576
          %305 = vsyncadd %s299, %s304
          %s306 = smul.addr %s35, 384
          %s307 = smul.addr %s306, 64
          %s308 = scalar_lea.hbm %s1, %s307
          %s309 = sshll.u32 %s302, 4
          %s310 = int_to_ptr.vmem [resolvable:$true] %s309
          %315 = dma.hbm_to_vmem [thread:$0]  %s308, 24576, %s310, %s299, 256, 256, 16
        $region24: #{tpu_custom_call.1} parent=15 // pred_fallthru
          _
        // Predicated region
        $region25: #{tpu_custom_call.1} parent=15 // pred_check
          %p316 = pneg %p114
        $region26: #{tpu_custom_call.1} parent=15 // pred_check_branch
          %318 = sbr.rel (%p316) target = $region28
        $region27: #{tpu_custom_call.1} parent=15 // pred_region
          %s319 = sand.u32 %s28, 1
          %s320 = scalar_lea.sflag [#allocation6], %s319
          %s321 = sand.u32 %s104, 1
          %s322 = smul.addr %s321, 4
          %s323 = scalar_lea.vmem [#allocation7], %s322
          %s325 = ssub.s32 64, 64
          %326 = vsyncadd %s320, %s325
          %s327 = smul.addr %s35, 4
          %s328 = smul.addr %s327, 16
          %s329 = scalar_lea.hbm %s2, %s328
          %s331 = sshll.u32 %s323, 4
          %s332 = int_to_ptr.vmem [resolvable:$true] %s331
          %334 = dma.hbm_to_vmem [thread:$0]  %s329, 64, %s332, %s320
        $region28: #{tpu_custom_call.1} parent=15 // pred_fallthru
          _
        // Predicated region
        $region29: #{tpu_custom_call.1} parent=15 // pred_check
          %p335 = pneg %p140
        $region30: #{tpu_custom_call.1} parent=15 // pred_check_branch
          %337 = sbr.rel (%p335) target = $region32
        $region31: #{tpu_custom_call.1} parent=15 // pred_region
          %s338 = sand.u32 %s28, 1
          %s339 = scalar_lea.sflag [#allocation9], %s338
          %s340 = sand.u32 %s130, 1
          %s341 = smul.addr %s340, 1024
          %s342 = scalar_lea.vmem [#allocation8], %s341
          %s344 = ssub.s32 16384, 16384
          %345 = vsyncadd %s339, %s344
          %s346 = smul.addr %s35, 256
          %s347 = smul.addr %s346, 64
          %s348 = scalar_lea.hbm %s3, %s347
          %s349 = sshll.u32 %s342, 4
          %s350 = int_to_ptr.vmem [resolvable:$true] %s349
          %355 = dma.hbm_to_vmem [thread:$0]  %s348, 16384, %s350, %s339, 256, 256, 16
        $region32: #{tpu_custom_call.1} parent=15 // pred_fallthru
          _
        // Predicated region
        $region33: #{tpu_custom_call.1} parent=15 // pred_check
          %p356 = pneg %p166
        $region34: #{tpu_custom_call.1} parent=15 // pred_check_branch
          %358 = sbr.rel (%p356) target = $region36
        $region35: #{tpu_custom_call.1} parent=15 // pred_region
          %s359 = sand.u32 %s28, 1
          %s360 = scalar_lea.sflag [#allocation9], %s359
          %s361 = sand.u32 %s156, 1
          %s362 = smul.addr %s361, 4
          %s363 = scalar_lea.vmem [#allocation10], %s362
          %s365 = ssub.s32 64, 64
          %366 = vsyncadd %s360, %s365
          %s367 = smul.addr %s35, 4
          %s368 = smul.addr %s367, 16
          %s369 = scalar_lea.hbm %s4, %s368
          %s371 = sshll.u32 %s363, 4
          %s372 = int_to_ptr.vmem [resolvable:$true] %s371
          %374 = dma.hbm_to_vmem [thread:$0]  %s369, 64, %s372, %s360
        $region36: #{tpu_custom_call.1} parent=15 // pred_fallthru
          _
        // Predicated region
        $region37: #{tpu_custom_call.1} parent=15 // pred_check
          %p375 = pneg %p192
        $region38: #{tpu_custom_call.1} parent=15 // pred_check_branch
          %377 = sbr.rel (%p375) target = $region40
        $region39: #{tpu_custom_call.1} parent=15 // pred_region
          %s378 = sand.u32 %s28, 1
          %s379 = scalar_lea.sflag [#allocation12], %s378
          %s380 = sand.u32 %s182, 1
          %s381 = smul.addr %s380, 4
          %s382 = scalar_lea.vmem [#allocation11], %s381
          %s384 = ssub.s32 64, 64
          %385 = vsyncadd %s379, %s384
          %s386 = smul.addr %s35, 4
          %s387 = smul.addr %s386, 16
          %s388 = scalar_lea.hbm %s5, %s387
          %s390 = sshll.u32 %s382, 4
          %s391 = int_to_ptr.vmem [resolvable:$true] %s390
          %393 = dma.hbm_to_vmem [thread:$0]  %s388, 64, %s391, %s379
        $region40: #{tpu_custom_call.1} parent=15 // pred_fallthru
          _
        // Predicated region
        $region41: #{tpu_custom_call.1} parent=15 // pred_check
          %p394 = pneg %p218
        $region42: #{tpu_custom_call.1} parent=15 // pred_check_branch
          %396 = sbr.rel (%p394) target = $region44
        $region43: #{tpu_custom_call.1} parent=15 // pred_region
          %s397 = sand.u32 %s28, 1
          %s398 = scalar_lea.sflag [#allocation12], %s397
          %s399 = sand.u32 %s208, 1
          %s400 = smul.addr %s399, 4
          %s401 = scalar_lea.vmem [#allocation13], %s400
          %s403 = ssub.s32 64, 64
          %404 = vsyncadd %s398, %s403
          %s405 = smul.addr %s35, 4
          %s406 = smul.addr %s405, 16
          %s407 = scalar_lea.hbm %s6, %s406
          %s409 = sshll.u32 %s401, 4
          %s410 = int_to_ptr.vmem [resolvable:$true] %s409
          %412 = dma.hbm_to_vmem [thread:$0]  %s407, 64, %s410, %s398
        $region44: #{tpu_custom_call.1} parent=15 // pred_fallthru
          _
      $region16: #{tpu_custom_call.1} parent=5 // pred_fallthru
        _
      %p413 = scmp.le.s32.totalorder 1, %s28
      %p414 = scmp.lt.s32.totalorder %s28, 5
      %p415 = pnand %p413, %p414
      %p416 = pneg %p415
      // Predicated region
      $region45: #{tpu_custom_call.1} parent=5 // pred_check
        _
      $region46: #{tpu_custom_call.1} parent=5 // pred_check_branch
        %418 = sbr.rel (%p415) target = $region48
      $region47: #{tpu_custom_call.1} parent=5 // pred_region
        %s419 = ssub.s32 %s28, 1
        %s420 = sand.u32 %s55, 1
        %s421 = scalar_lea.sflag [#allocation3], %s420
        %s422 = sand.u32 %s55, 1
        %s423 = smul.addr %s422, 96
        %s424 = scalar_lea.vmem [#allocation2], %s423
        // Predicated region
        $region49: #{tpu_custom_call.1} parent=47 // pred_check
          %p425 = pneg %p68
        $region50: #{tpu_custom_call.1} parent=47 // pred_check_branch
          %427 = sbr.rel (%p425) target = $region52
        $region51: #{tpu_custom_call.1} parent=47 // pred_region
          %428 = dma.done %s421, 1536
        $region52: #{tpu_custom_call.1} parent=47 // pred_fallthru
          _
        %s429 = sand.u32 %s33, 1
        %s430 = scalar_lea.sflag [#allocation6], %s429
        %s431 = sand.u32 %s81, 1
        %s432 = smul.addr %s431, 1536
        %s433 = scalar_lea.vmem [#allocation5], %s432
        // Predicated region
        $region53: #{tpu_custom_call.1} parent=47 // pred_check
          %p434 = pneg %p94
        $region54: #{tpu_custom_call.1} parent=47 // pred_check_branch
          %436 = sbr.rel (%p434) target = $region56
        $region55: #{tpu_custom_call.1} parent=47 // pred_region
          %437 = dma.done %s430, 24576
        $region56: #{tpu_custom_call.1} parent=47 // pred_fallthru
          _
        %s438 = sand.u32 %s33, 1
        %s439 = scalar_lea.sflag [#allocation6], %s438
        %s440 = sand.u32 %s107, 1
        %s441 = smul.addr %s440, 4
        %s442 = scalar_lea.vmem [#allocation7], %s441
        // Predicated region
        $region57: #{tpu_custom_call.1} parent=47 // pred_check
          %p443 = pneg %p120
        $region58: #{tpu_custom_call.1} parent=47 // pred_check_branch
          %445 = sbr.rel (%p443) target = $region60
        $region59: #{tpu_custom_call.1} parent=47 // pred_region
          %446 = dma.done %s439, 64
        $region60: #{tpu_custom_call.1} parent=47 // pred_fallthru
          _
        %s447 = sand.u32 %s33, 1
        %s448 = scalar_lea.sflag [#allocation9], %s447
        %s449 = sand.u32 %s133, 1
        %s450 = smul.addr %s449, 1024
        %s451 = scalar_lea.vmem [#allocation8], %s450
        // Predicated region
        $region61: #{tpu_custom_call.1} parent=47 // pred_check
          %p452 = pneg %p146
        $region62: #{tpu_custom_call.1} parent=47 // pred_check_branch
          %454 = sbr.rel (%p452) target = $region64
        $region63: #{tpu_custom_call.1} parent=47 // pred_region
          %455 = dma.done %s448, 16384
        $region64: #{tpu_custom_call.1} parent=47 // pred_fallthru
          _
        %s456 = sand.u32 %s33, 1
        %s457 = scalar_lea.sflag [#allocation9], %s456
        %s458 = sand.u32 %s159, 1
        %s459 = smul.addr %s458, 4
        %s460 = scalar_lea.vmem [#allocation10], %s459
        // Predicated region
        $region65: #{tpu_custom_call.1} parent=47 // pred_check
          %p461 = pneg %p172
        $region66: #{tpu_custom_call.1} parent=47 // pred_check_branch
          %463 = sbr.rel (%p461) target = $region68
        $region67: #{tpu_custom_call.1} parent=47 // pred_region
          %464 = dma.done %s457, 64
        $region68: #{tpu_custom_call.1} parent=47 // pred_fallthru
          _
        %s465 = sand.u32 %s33, 1
        %s466 = scalar_lea.sflag [#allocation12], %s465
        %s467 = sand.u32 %s185, 1
        %s468 = smul.addr %s467, 4
        %s469 = scalar_lea.vmem [#allocation11], %s468
        // Predicated region
        $region69: #{tpu_custom_call.1} parent=47 // pred_check
          %p470 = pneg %p198
        $region70: #{tpu_custom_call.1} parent=47 // pred_check_branch
          %472 = sbr.rel (%p470) target = $region72
        $region71: #{tpu_custom_call.1} parent=47 // pred_region
          %473 = dma.done %s466, 64
        $region72: #{tpu_custom_call.1} parent=47 // pred_fallthru
          _
        %s474 = sand.u32 %s33, 1
        %s475 = scalar_lea.sflag [#allocation12], %s474
        %s476 = sand.u32 %s211, 1
        %s477 = smul.addr %s476, 4
        %s478 = scalar_lea.vmem [#allocation13], %s477
        // Predicated region
        $region73: #{tpu_custom_call.1} parent=47 // pred_check
          %p479 = pneg %p224
        $region74: #{tpu_custom_call.1} parent=47 // pred_check_branch
          %481 = sbr.rel (%p479) target = $region76
        $region75: #{tpu_custom_call.1} parent=47 // pred_region
          %482 = dma.done %s475, 64
        $region76: #{tpu_custom_call.1} parent=47 // pred_fallthru
          _
        %s483 = sand.u32 %s55, 1
        %s484 = scalar_lea.sflag [#allocation3], %s483
        %s485 = sand.u32 %s55, 1
        %s486 = smul.addr %s485, 96
        %s487 = scalar_lea.vmem [#allocation2], %s486
        %p488 = pneg %p68
        %p489 = pneg %p65
        %s490 = sand.u32 %s33, 1
        %s491 = scalar_lea.sflag [#allocation6], %s490
        %s492 = sand.u32 %s81, 1
        %s493 = smul.addr %s492, 1536
        %s494 = scalar_lea.vmem [#allocation5], %s493
        %p495 = pneg %p94
        %p496 = pneg %p91
        %s497 = sand.u32 %s33, 1
        %s498 = scalar_lea.sflag [#allocation6], %s497
        %s499 = sand.u32 %s107, 1
        %s500 = smul.addr %s499, 4
        %s501 = scalar_lea.vmem [#allocation7], %s500
        %p502 = pneg %p120
        %p503 = pneg %p117
        %s504 = sand.u32 %s33, 1
        %s505 = scalar_lea.sflag [#allocation9], %s504
        %s506 = sand.u32 %s133, 1
        %s507 = smul.addr %s506, 1024
        %s508 = scalar_lea.vmem [#allocation8], %s507
        %p509 = pneg %p146
        %p510 = pneg %p143
        %s511 = sand.u32 %s33, 1
        %s512 = scalar_lea.sflag [#allocation9], %s511
        %s513 = sand.u32 %s159, 1
        %s514 = smul.addr %s513, 4
        %s515 = scalar_lea.vmem [#allocation10], %s514
        %p516 = pneg %p172
        %p517 = pneg %p169
        %s518 = sand.u32 %s33, 1
        %s519 = scalar_lea.sflag [#allocation12], %s518
        %s520 = sand.u32 %s185, 1
        %s521 = smul.addr %s520, 4
        %s522 = scalar_lea.vmem [#allocation11], %s521
        %p523 = pneg %p198
        %p524 = pneg %p195
        %s525 = sand.u32 %s33, 1
        %s526 = scalar_lea.sflag [#allocation12], %s525
        %s527 = sand.u32 %s211, 1
        %s528 = smul.addr %s527, 4
        %s529 = scalar_lea.vmem [#allocation13], %s528
        %p530 = pneg %p224
        %p531 = pneg %p221
        %p532 = pneg %p252
        %p533 = pneg %p249
        %s534 = sand.u32 %s239, 1
        %s535 = scalar_lea.sflag [#allocation4], %s534
        %s536 = sand.u32 %s239, 1
        %s537 = smul.addr %s536, 64
        %s538 = scalar_lea.vmem [#allocation14], %s537
        %s539 = smul.u32 2, %s38
        %s540 = smul.u32 2, %s38
        %v541 = vld [vmem:[%s424] sm:$0xff]
        %v542 = vld [vmem:[%s424 + $0x8] sm:$0xff]
        %v543 = vld [vmem:[%s424 + $0x10] sm:$0xff]
        %v544 = vld [vmem:[%s424 + $0x18] sm:$0xff]
        %v545 = vld [vmem:[%s424 + $0x20] sm:$0xff]
        %v546 = vld [vmem:[%s424 + $0x28] sm:$0xff]
        %v547 = vld [vmem:[%s424 + $0x30] sm:$0xff]
        %v548 = vld [vmem:[%s424 + $0x38] sm:$0xff]
        %v549 = vld [vmem:[%s424 + $0x40] sm:$0xff]
        %v550 = vld [vmem:[%s424 + $0x48] sm:$0xff]
        %v551 = vld [vmem:[%s424 + $0x50] sm:$0xff]
        %v552 = vld [vmem:[%s424 + $0x58] sm:$0xff]
        %v553 = vpack.c.bf16 %v547, %v541
        %v554 = vpack.c.bf16 %v548, %v542
        %v555 = vpack.c.bf16 %v549, %v543
        %v556 = vpack.c.bf16 %v550, %v544
        %v557 = vpack.c.bf16 %v551, %v545
        %v558 = vpack.c.bf16 %v552, %v546
        %v559 = vld [vmem:[%s433] sm:$0xff]
        %v560 = vld [vmem:[%s433 + $0x8] sm:$0xff]
        %v561 = vld [vmem:[%s433 + $0x10] sm:$0xff]
        %v562 = vld [vmem:[%s433 + $0x18] sm:$0xff]
        %v563 = vld [vmem:[%s433 + $0x20] sm:$0xff]
        %v564 = vld [vmem:[%s433 + $0x28] sm:$0xff]
        %v565 = vld [vmem:[%s433 + $0x30] sm:$0xff]
        %v566 = vld [vmem:[%s433 + $0x38] sm:$0xff]
        %v567 = vld [vmem:[%s433 + $0x40] sm:$0xff]
        %v568 = vld [vmem:[%s433 + $0x48] sm:$0xff]
        %v569 = vld [vmem:[%s433 + $0x50] sm:$0xff]
        %v570 = vld [vmem:[%s433 + $0x58] sm:$0xff]
        %v571 = vld [vmem:[%s433 + $0x60] sm:$0xff]
        %v572 = vld [vmem:[%s433 + $0x68] sm:$0xff]
        %v573 = vld [vmem:[%s433 + $0x70] sm:$0xff]
        %v574 = vld [vmem:[%s433 + $0x78] sm:$0xff]
        %v575 = vld [vmem:[%s433 + $0x80] sm:$0xff]
        %v576 = vld [vmem:[%s433 + $0x88] sm:$0xff]
        %v577 = vld [vmem:[%s433 + $0x90] sm:$0xff]
        %v578 = vld [vmem:[%s433 + $0x98] sm:$0xff]
        %v579 = vld [vmem:[%s433 + $0xa0] sm:$0xff]
        %v580 = vld [vmem:[%s433 + $0xa8] sm:$0xff]
        %v581 = vld [vmem:[%s433 + $0xb0] sm:$0xff]
        %v582 = vld [vmem:[%s433 + $0xb8] sm:$0xff]
        %v583 = vld [vmem:[%s433 + $0xc0] sm:$0xff]
        %v584 = vld [vmem:[%s433 + $0xc8] sm:$0xff]
        %v585 = vld [vmem:[%s433 + $0xd0] sm:$0xff]
        %v586 = vld [vmem:[%s433 + $0xd8] sm:$0xff]
        %v587 = vld [vmem:[%s433 + $0xe0] sm:$0xff]
        %v588 = vld [vmem:[%s433 + $0xe8] sm:$0xff]
        %v589 = vld [vmem:[%s433 + $0xf0] sm:$0xff]
        %v590 = vld [vmem:[%s433 + $0xf8] sm:$0xff]
        %v591 = vld [vmem:[%s433 + $0x100] sm:$0xff]
        %v592 = vld [vmem:[%s433 + $0x108] sm:$0xff]
        %v593 = vld [vmem:[%s433 + $0x110] sm:$0xff]
        %v594 = vld [vmem:[%s433 + $0x118] sm:$0xff]
        %v595 = vld [vmem:[%s433 + $0x120] sm:$0xff]
        %v596 = vld [vmem:[%s433 + $0x128] sm:$0xff]
        %v597 = vld [vmem:[%s433 + $0x130] sm:$0xff]
        %v598 = vld [vmem:[%s433 + $0x138] sm:$0xff]
        %v599 = vld [vmem:[%s433 + $0x140] sm:$0xff]
        %v600 = vld [vmem:[%s433 + $0x148] sm:$0xff]
        %v601 = vld [vmem:[%s433 + $0x150] sm:$0xff]
        %v602 = vld [vmem:[%s433 + $0x158] sm:$0xff]
        %v603 = vld [vmem:[%s433 + $0x160] sm:$0xff]
        %v604 = vld [vmem:[%s433 + $0x168] sm:$0xff]
        %v605 = vld [vmem:[%s433 + $0x170] sm:$0xff]
        %v606 = vld [vmem:[%s433 + $0x178] sm:$0xff]
        %v607 = vld [vmem:[%s433 + $0x180] sm:$0xff]
        %v608 = vld [vmem:[%s433 + $0x188] sm:$0xff]
        %v609 = vld [vmem:[%s433 + $0x190] sm:$0xff]
        %v610 = vld [vmem:[%s433 + $0x198] sm:$0xff]
        %v611 = vld [vmem:[%s433 + $0x1a0] sm:$0xff]
        %v612 = vld [vmem:[%s433 + $0x1a8] sm:$0xff]
        %v613 = vld [vmem:[%s433 + $0x1b0] sm:$0xff]
        %v614 = vld [vmem:[%s433 + $0x1b8] sm:$0xff]
        %v615 = vld [vmem:[%s433 + $0x1c0] sm:$0xff]
        %v616 = vld [vmem:[%s433 + $0x1c8] sm:$0xff]
        %v617 = vld [vmem:[%s433 + $0x1d0] sm:$0xff]
        %v618 = vld [vmem:[%s433 + $0x1d8] sm:$0xff]
        %v619 = vld [vmem:[%s433 + $0x1e0] sm:$0xff]
        %v620 = vld [vmem:[%s433 + $0x1e8] sm:$0xff]
        %v621 = vld [vmem:[%s433 + $0x1f0] sm:$0xff]
        %v622 = vld [vmem:[%s433 + $0x1f8] sm:$0xff]
        %v623 = vld [vmem:[%s433 + $0x200] sm:$0xff]
        %v624 = vld [vmem:[%s433 + $0x208] sm:$0xff]
        %v625 = vld [vmem:[%s433 + $0x210] sm:$0xff]
        %v626 = vld [vmem:[%s433 + $0x218] sm:$0xff]
        %v627 = vld [vmem:[%s433 + $0x220] sm:$0xff]
        %v628 = vld [vmem:[%s433 + $0x228] sm:$0xff]
        %v629 = vld [vmem:[%s433 + $0x230] sm:$0xff]
        %v630 = vld [vmem:[%s433 + $0x238] sm:$0xff]
        %v631 = vld [vmem:[%s433 + $0x240] sm:$0xff]
        %v632 = vld [vmem:[%s433 + $0x248] sm:$0xff]
        %v633 = vld [vmem:[%s433 + $0x250] sm:$0xff]
        %v634 = vld [vmem:[%s433 + $0x258] sm:$0xff]
        %v635 = vld [vmem:[%s433 + $0x260] sm:$0xff]
        %v636 = vld [vmem:[%s433 + $0x268] sm:$0xff]
        %v637 = vld [vmem:[%s433 + $0x270] sm:$0xff]
        %v638 = vld [vmem:[%s433 + $0x278] sm:$0xff]
        %v639 = vld [vmem:[%s433 + $0x280] sm:$0xff]
        %v640 = vld [vmem:[%s433 + $0x288] sm:$0xff]
        %v641 = vld [vmem:[%s433 + $0x290] sm:$0xff]
        %v642 = vld [vmem:[%s433 + $0x298] sm:$0xff]
        %v643 = vld [vmem:[%s433 + $0x2a0] sm:$0xff]
        %v644 = vld [vmem:[%s433 + $0x2a8] sm:$0xff]
        %v645 = vld [vmem:[%s433 + $0x2b0] sm:$0xff]
        %v646 = vld [vmem:[%s433 + $0x2b8] sm:$0xff]
        %v647 = vld [vmem:[%s433 + $0x2c0] sm:$0xff]
        %v648 = vld [vmem:[%s433 + $0x2c8] sm:$0xff]
        %v649 = vld [vmem:[%s433 + $0x2d0] sm:$0xff]
        %v650 = vld [vmem:[%s433 + $0x2d8] sm:$0xff]
        %v651 = vld [vmem:[%s433 + $0x2e0] sm:$0xff]
        %v652 = vld [vmem:[%s433 + $0x2e8] sm:$0xff]
        %v653 = vld [vmem:[%s433 + $0x2f0] sm:$0xff]
        %v654 = vld [vmem:[%s433 + $0x2f8] sm:$0xff]
        %v655 = vld [vmem:[%s433 + $0x300] sm:$0xff]
        %v656 = vld [vmem:[%s433 + $0x308] sm:$0xff]
        %v657 = vld [vmem:[%s433 + $0x310] sm:$0xff]
        %v658 = vld [vmem:[%s433 + $0x318] sm:$0xff]
        %v659 = vld [vmem:[%s433 + $0x320] sm:$0xff]
        %v660 = vld [vmem:[%s433 + $0x328] sm:$0xff]
        %v661 = vld [vmem:[%s433 + $0x330] sm:$0xff]
        %v662 = vld [vmem:[%s433 + $0x338] sm:$0xff]
        %v663 = vld [vmem:[%s433 + $0x340] sm:$0xff]
        %v664 = vld [vmem:[%s433 + $0x348] sm:$0xff]
        %v665 = vld [vmem:[%s433 + $0x350] sm:$0xff]
        %v666 = vld [vmem:[%s433 + $0x358] sm:$0xff]
        %v667 = vld [vmem:[%s433 + $0x360] sm:$0xff]
        %v668 = vld [vmem:[%s433 + $0x368] sm:$0xff]
        %v669 = vld [vmem:[%s433 + $0x370] sm:$0xff]
        %v670 = vld [vmem:[%s433 + $0x378] sm:$0xff]
        %v671 = vld [vmem:[%s433 + $0x380] sm:$0xff]
        %v672 = vld [vmem:[%s433 + $0x388] sm:$0xff]
        %v673 = vld [vmem:[%s433 + $0x390] sm:$0xff]
        %v674 = vld [vmem:[%s433 + $0x398] sm:$0xff]
        %v675 = vld [vmem:[%s433 + $0x3a0] sm:$0xff]
        %v676 = vld [vmem:[%s433 + $0x3a8] sm:$0xff]
        %v677 = vld [vmem:[%s433 + $0x3b0] sm:$0xff]
        %v678 = vld [vmem:[%s433 + $0x3b8] sm:$0xff]
        %v679 = vld [vmem:[%s433 + $0x3c0] sm:$0xff]
        %v680 = vld [vmem:[%s433 + $0x3c8] sm:$0xff]
        %v681 = vld [vmem:[%s433 + $0x3d0] sm:$0xff]
        %v682 = vld [vmem:[%s433 + $0x3d8] sm:$0xff]
        %v683 = vld [vmem:[%s433 + $0x3e0] sm:$0xff]
        %v684 = vld [vmem:[%s433 + $0x3e8] sm:$0xff]
        %v685 = vld [vmem:[%s433 + $0x3f0] sm:$0xff]
        %v686 = vld [vmem:[%s433 + $0x3f8] sm:$0xff]
        %v687 = vld [vmem:[%s433 + $0x400] sm:$0xff]
        %v688 = vld [vmem:[%s433 + $0x408] sm:$0xff]
        %v689 = vld [vmem:[%s433 + $0x410] sm:$0xff]
        %v690 = vld [vmem:[%s433 + $0x418] sm:$0xff]
        %v691 = vld [vmem:[%s433 + $0x420] sm:$0xff]
        %v692 = vld [vmem:[%s433 + $0x428] sm:$0xff]
        %v693 = vld [vmem:[%s433 + $0x430] sm:$0xff]
        %v694 = vld [vmem:[%s433 + $0x438] sm:$0xff]
        %v695 = vld [vmem:[%s433 + $0x440] sm:$0xff]
        %v696 = vld [vmem:[%s433 + $0x448] sm:$0xff]
        %v697 = vld [vmem:[%s433 + $0x450] sm:$0xff]
        %v698 = vld [vmem:[%s433 + $0x458] sm:$0xff]
        %v699 = vld [vmem:[%s433 + $0x460] sm:$0xff]
        %v700 = vld [vmem:[%s433 + $0x468] sm:$0xff]
        %v701 = vld [vmem:[%s433 + $0x470] sm:$0xff]
        %v702 = vld [vmem:[%s433 + $0x478] sm:$0xff]
        %v703 = vld [vmem:[%s433 + $0x480] sm:$0xff]
        %v704 = vld [vmem:[%s433 + $0x488] sm:$0xff]
        %v705 = vld [vmem:[%s433 + $0x490] sm:$0xff]
        %v706 = vld [vmem:[%s433 + $0x498] sm:$0xff]
        %v707 = vld [vmem:[%s433 + $0x4a0] sm:$0xff]
        %v708 = vld [vmem:[%s433 + $0x4a8] sm:$0xff]
        %v709 = vld [vmem:[%s433 + $0x4b0] sm:$0xff]
        %v710 = vld [vmem:[%s433 + $0x4b8] sm:$0xff]
        %v711 = vld [vmem:[%s433 + $0x4c0] sm:$0xff]
        %v712 = vld [vmem:[%s433 + $0x4c8] sm:$0xff]
        %v713 = vld [vmem:[%s433 + $0x4d0] sm:$0xff]
        %v714 = vld [vmem:[%s433 + $0x4d8] sm:$0xff]
        %v715 = vld [vmem:[%s433 + $0x4e0] sm:$0xff]
        %v716 = vld [vmem:[%s433 + $0x4e8] sm:$0xff]
        %v717 = vld [vmem:[%s433 + $0x4f0] sm:$0xff]
        %v718 = vld [vmem:[%s433 + $0x4f8] sm:$0xff]
        %v719 = vld [vmem:[%s433 + $0x500] sm:$0xff]
        %v720 = vld [vmem:[%s433 + $0x508] sm:$0xff]
        %v721 = vld [vmem:[%s433 + $0x510] sm:$0xff]
        %v722 = vld [vmem:[%s433 + $0x518] sm:$0xff]
        %v723 = vld [vmem:[%s433 + $0x520] sm:$0xff]
        %v724 = vld [vmem:[%s433 + $0x528] sm:$0xff]
        %v725 = vld [vmem:[%s433 + $0x530] sm:$0xff]
        %v726 = vld [vmem:[%s433 + $0x538] sm:$0xff]
        %v727 = vld [vmem:[%s433 + $0x540] sm:$0xff]
        %v728 = vld [vmem:[%s433 + $0x548] sm:$0xff]
        %v729 = vld [vmem:[%s433 + $0x550] sm:$0xff]
        %v730 = vld [vmem:[%s433 + $0x558] sm:$0xff]
        %v731 = vld [vmem:[%s433 + $0x560] sm:$0xff]
        %v732 = vld [vmem:[%s433 + $0x568] sm:$0xff]
        %v733 = vld [vmem:[%s433 + $0x570] sm:$0xff]
        %v734 = vld [vmem:[%s433 + $0x578] sm:$0xff]
        %v735 = vld [vmem:[%s433 + $0x580] sm:$0xff]
        %v736 = vld [vmem:[%s433 + $0x588] sm:$0xff]
        %v737 = vld [vmem:[%s433 + $0x590] sm:$0xff]
        %v738 = vld [vmem:[%s433 + $0x598] sm:$0xff]
        %v739 = vld [vmem:[%s433 + $0x5a0] sm:$0xff]
        %v740 = vld [vmem:[%s433 + $0x5a8] sm:$0xff]
        %v741 = vld [vmem:[%s433 + $0x5b0] sm:$0xff]
        %v742 = vld [vmem:[%s433 + $0x5b8] sm:$0xff]
        %v743 = vld [vmem:[%s433 + $0x5c0] sm:$0xff]
        %v744 = vld [vmem:[%s433 + $0x5c8] sm:$0xff]
        %v745 = vld [vmem:[%s433 + $0x5d0] sm:$0xff]
        %v746 = vld [vmem:[%s433 + $0x5d8] sm:$0xff]
        %v747 = vld [vmem:[%s433 + $0x5e0] sm:$0xff]
        %v748 = vld [vmem:[%s433 + $0x5e8] sm:$0xff]
        %v749 = vld [vmem:[%s433 + $0x5f0] sm:$0xff]
        %v750 = vld [vmem:[%s433 + $0x5f8] sm:$0xff]
        %v751 = vld [vmem:[%s442] sm:$0xf]
        %v753 = vlaneseq
        %v754 = vshrl.u32 %v753, 7
        %v755 = vsub.s32 0, %v754
        %v756 = vrot.slane %v751, %v755
        %v757 = vlaneseq
        %v758 = vshrl.u32 %v757, 7
        %v759 = vsub.s32 1, %v758
        %v760 = vrot.slane %v751, %v759
        %v761 = vlaneseq
        %v762 = vshrl.u32 %v761, 7
        %v763 = vsub.s32 2, %v762
        %v764 = vrot.slane %v751, %v763
        %v765 = vlaneseq
        %v766 = vshrl.u32 %v765, 7
        %v767 = vsub.s32 3, %v766
        %v768 = vrot.slane %v751, %v767
        %v965 = vunpack.c.l.b16 %v559
        %v966 = vunpack.c.h.b16 %v559
        %v967 = vunpack.c.l.b16 %v560
        %v968 = vunpack.c.h.b16 %v560
        %v969 = vunpack.c.l.b16 %v561
        %v970 = vunpack.c.h.b16 %v561
        %v971 = vunpack.c.l.b16 %v562
        %v972 = vunpack.c.h.b16 %v562
        %v973 = vunpack.c.l.b16 %v563
        %v974 = vunpack.c.h.b16 %v563
        %v975 = vunpack.c.l.b16 %v564
        %v976 = vunpack.c.h.b16 %v564
        %v977 = vunpack.c.l.b16 %v565
        %v978 = vunpack.c.h.b16 %v565
        %v979 = vunpack.c.l.b16 %v566
        %v980 = vunpack.c.h.b16 %v566
        %v981 = vunpack.c.l.b16 %v567
        %v982 = vunpack.c.h.b16 %v567
        %v983 = vunpack.c.l.b16 %v568
        %v984 = vunpack.c.h.b16 %v568
        %v985 = vunpack.c.l.b16 %v569
        %v986 = vunpack.c.h.b16 %v569
        %v987 = vunpack.c.l.b16 %v570
        %v988 = vunpack.c.h.b16 %v570
        %v989 = vunpack.c.l.b16 %v571
        %v990 = vunpack.c.h.b16 %v571
        %v991 = vunpack.c.l.b16 %v572
        %v992 = vunpack.c.h.b16 %v572
        %v993 = vunpack.c.l.b16 %v573
        %v994 = vunpack.c.h.b16 %v573
        %v995 = vunpack.c.l.b16 %v574
        %v996 = vunpack.c.h.b16 %v574
        %v997 = vunpack.c.l.b16 %v575
        %v998 = vunpack.c.h.b16 %v575
        %v999 = vunpack.c.l.b16 %v576
        %v1000 = vunpack.c.h.b16 %v576
        %v1001 = vunpack.c.l.b16 %v577
        %v1002 = vunpack.c.h.b16 %v577
        %v1003 = vunpack.c.l.b16 %v578
        %v1004 = vunpack.c.h.b16 %v578
        %v1005 = vunpack.c.l.b16 %v579
        %v1006 = vunpack.c.h.b16 %v579
        %v1007 = vunpack.c.l.b16 %v580
        %v1008 = vunpack.c.h.b16 %v580
        %v1009 = vunpack.c.l.b16 %v581
        %v1010 = vunpack.c.h.b16 %v581
        %v1011 = vunpack.c.l.b16 %v582
        %v1012 = vunpack.c.h.b16 %v582
        %v1013 = vunpack.c.l.b16 %v583
        %v1014 = vunpack.c.h.b16 %v583
        %v1015 = vunpack.c.l.b16 %v584
        %v1016 = vunpack.c.h.b16 %v584
        %v1017 = vunpack.c.l.b16 %v585
        %v1018 = vunpack.c.h.b16 %v585
        %v1019 = vunpack.c.l.b16 %v586
        %v1020 = vunpack.c.h.b16 %v586
        %v1021 = vunpack.c.l.b16 %v587
        %v1022 = vunpack.c.h.b16 %v587
        %v1023 = vunpack.c.l.b16 %v588
        %v1024 = vunpack.c.h.b16 %v588
        %v1025 = vunpack.c.l.b16 %v589
        %v1026 = vunpack.c.h.b16 %v589
        %v1027 = vunpack.c.l.b16 %v590
        %v1028 = vunpack.c.h.b16 %v590
        %v1029 = vunpack.c.l.b16 %v591
        %v1030 = vunpack.c.h.b16 %v591
        %v1031 = vunpack.c.l.b16 %v592
        %v1032 = vunpack.c.h.b16 %v592
        %v1033 = vunpack.c.l.b16 %v593
        %v1034 = vunpack.c.h.b16 %v593
        %v1035 = vunpack.c.l.b16 %v594
        %v1036 = vunpack.c.h.b16 %v594
        %v1037 = vunpack.c.l.b16 %v595
        %v1038 = vunpack.c.h.b16 %v595
        %v1039 = vunpack.c.l.b16 %v596
        %v1040 = vunpack.c.h.b16 %v596
        %v1041 = vunpack.c.l.b16 %v597
        %v1042 = vunpack.c.h.b16 %v597
        %v1043 = vunpack.c.l.b16 %v598
        %v1044 = vunpack.c.h.b16 %v598
        %v1045 = vunpack.c.l.b16 %v599
        %v1046 = vunpack.c.h.b16 %v599
        %v1047 = vunpack.c.l.b16 %v600
        %v1048 = vunpack.c.h.b16 %v600
        %v1049 = vunpack.c.l.b16 %v601
        %v1050 = vunpack.c.h.b16 %v601
        %v1051 = vunpack.c.l.b16 %v602
        %v1052 = vunpack.c.h.b16 %v602
        %v1053 = vunpack.c.l.b16 %v603
        %v1054 = vunpack.c.h.b16 %v603
        %v1055 = vunpack.c.l.b16 %v604
        %v1056 = vunpack.c.h.b16 %v604
        %v1057 = vunpack.c.l.b16 %v605
        %v1058 = vunpack.c.h.b16 %v605
        %v1059 = vunpack.c.l.b16 %v606
        %v1060 = vunpack.c.h.b16 %v606
        %v1061 = vunpack.c.l.b16 %v607
        %v1062 = vunpack.c.h.b16 %v607
        %v1063 = vunpack.c.l.b16 %v608
        %v1064 = vunpack.c.h.b16 %v608
        %v1065 = vunpack.c.l.b16 %v609
        %v1066 = vunpack.c.h.b16 %v609
        %v1067 = vunpack.c.l.b16 %v610
        %v1068 = vunpack.c.h.b16 %v610
        %v1069 = vunpack.c.l.b16 %v611
        %v1070 = vunpack.c.h.b16 %v611
        %v1071 = vunpack.c.l.b16 %v612
        %v1072 = vunpack.c.h.b16 %v612
        %v1073 = vunpack.c.l.b16 %v613
        %v1074 = vunpack.c.h.b16 %v613
        %v1075 = vunpack.c.l.b16 %v614
        %v1076 = vunpack.c.h.b16 %v614
        %v1077 = vunpack.c.l.b16 %v615
        %v1078 = vunpack.c.h.b16 %v615
        %v1079 = vunpack.c.l.b16 %v616
        %v1080 = vunpack.c.h.b16 %v616
        %v1081 = vunpack.c.l.b16 %v617
        %v1082 = vunpack.c.h.b16 %v617
        %v1083 = vunpack.c.l.b16 %v618
        %v1084 = vunpack.c.h.b16 %v618
        %v1085 = vunpack.c.l.b16 %v619
        %v1086 = vunpack.c.h.b16 %v619
        %v1087 = vunpack.c.l.b16 %v620
        %v1088 = vunpack.c.h.b16 %v620
        %v1089 = vunpack.c.l.b16 %v621
        %v1090 = vunpack.c.h.b16 %v621
        %v1091 = vunpack.c.l.b16 %v622
        %v1092 = vunpack.c.h.b16 %v622
        %v1093 = vunpack.c.l.b16 %v623
        %v1094 = vunpack.c.h.b16 %v623
        %v1095 = vunpack.c.l.b16 %v624
        %v1096 = vunpack.c.h.b16 %v624
        %v1097 = vunpack.c.l.b16 %v625
        %v1098 = vunpack.c.h.b16 %v625
        %v1099 = vunpack.c.l.b16 %v626
        %v1100 = vunpack.c.h.b16 %v626
        %v1101 = vunpack.c.l.b16 %v627
        %v1102 = vunpack.c.h.b16 %v627
        %v1103 = vunpack.c.l.b16 %v628
        %v1104 = vunpack.c.h.b16 %v628
        %v1105 = vunpack.c.l.b16 %v629
        %v1106 = vunpack.c.h.b16 %v629
        %v1107 = vunpack.c.l.b16 %v630
        %v1108 = vunpack.c.h.b16 %v630
        %v1109 = vunpack.c.l.b16 %v631
        %v1110 = vunpack.c.h.b16 %v631
        %v1111 = vunpack.c.l.b16 %v632
        %v1112 = vunpack.c.h.b16 %v632
        %v1113 = vunpack.c.l.b16 %v633
        %v1114 = vunpack.c.h.b16 %v633
        %v1115 = vunpack.c.l.b16 %v634
        %v1116 = vunpack.c.h.b16 %v634
        %v1117 = vunpack.c.l.b16 %v635
        %v1118 = vunpack.c.h.b16 %v635
        %v1119 = vunpack.c.l.b16 %v636
        %v1120 = vunpack.c.h.b16 %v636
        %v1121 = vunpack.c.l.b16 %v637
        %v1122 = vunpack.c.h.b16 %v637
        %v1123 = vunpack.c.l.b16 %v638
        %v1124 = vunpack.c.h.b16 %v638
        %v1125 = vunpack.c.l.b16 %v639
        %v1126 = vunpack.c.h.b16 %v639
        %v1127 = vunpack.c.l.b16 %v640
        %v1128 = vunpack.c.h.b16 %v640
        %v1129 = vunpack.c.l.b16 %v641
        %v1130 = vunpack.c.h.b16 %v641
        %v1131 = vunpack.c.l.b16 %v642
        %v1132 = vunpack.c.h.b16 %v642
        %v1133 = vunpack.c.l.b16 %v643
        %v1134 = vunpack.c.h.b16 %v643
        %v1135 = vunpack.c.l.b16 %v644
        %v1136 = vunpack.c.h.b16 %v644
        %v1137 = vunpack.c.l.b16 %v645
        %v1138 = vunpack.c.h.b16 %v645
        %v1139 = vunpack.c.l.b16 %v646
        %v1140 = vunpack.c.h.b16 %v646
        %v1141 = vunpack.c.l.b16 %v647
        %v1142 = vunpack.c.h.b16 %v647
        %v1143 = vunpack.c.l.b16 %v648
        %v1144 = vunpack.c.h.b16 %v648
        %v1145 = vunpack.c.l.b16 %v649
        %v1146 = vunpack.c.h.b16 %v649
        %v1147 = vunpack.c.l.b16 %v650
        %v1148 = vunpack.c.h.b16 %v650
        %v1149 = vunpack.c.l.b16 %v651
        %v1150 = vunpack.c.h.b16 %v651
        %v1151 = vunpack.c.l.b16 %v652
        %v1152 = vunpack.c.h.b16 %v652
        %v1153 = vunpack.c.l.b16 %v653
        %v1154 = vunpack.c.h.b16 %v653
        %v1155 = vunpack.c.l.b16 %v654
        %v1156 = vunpack.c.h.b16 %v654
        %v1157 = vunpack.c.l.b16 %v655
        %v1158 = vunpack.c.h.b16 %v655
        %v1159 = vunpack.c.l.b16 %v656
        %v1160 = vunpack.c.h.b16 %v656
        %v1161 = vunpack.c.l.b16 %v657
        %v1162 = vunpack.c.h.b16 %v657
        %v1163 = vunpack.c.l.b16 %v658
        %v1164 = vunpack.c.h.b16 %v658
        %v1165 = vunpack.c.l.b16 %v659
        %v1166 = vunpack.c.h.b16 %v659
        %v1167 = vunpack.c.l.b16 %v660
        %v1168 = vunpack.c.h.b16 %v660
        %v1169 = vunpack.c.l.b16 %v661
        %v1170 = vunpack.c.h.b16 %v661
        %v1171 = vunpack.c.l.b16 %v662
        %v1172 = vunpack.c.h.b16 %v662
        %v1173 = vunpack.c.l.b16 %v663
        %v1174 = vunpack.c.h.b16 %v663
        %v1175 = vunpack.c.l.b16 %v664
        %v1176 = vunpack.c.h.b16 %v664
        %v1177 = vunpack.c.l.b16 %v665
        %v1178 = vunpack.c.h.b16 %v665
        %v1179 = vunpack.c.l.b16 %v666
        %v1180 = vunpack.c.h.b16 %v666
        %v1181 = vunpack.c.l.b16 %v667
        %v1182 = vunpack.c.h.b16 %v667
        %v1183 = vunpack.c.l.b16 %v668
        %v1184 = vunpack.c.h.b16 %v668
        %v1185 = vunpack.c.l.b16 %v669
        %v1186 = vunpack.c.h.b16 %v669
        %v1187 = vunpack.c.l.b16 %v670
        %v1188 = vunpack.c.h.b16 %v670
        %v1189 = vunpack.c.l.b16 %v671
        %v1190 = vunpack.c.h.b16 %v671
        %v1191 = vunpack.c.l.b16 %v672
        %v1192 = vunpack.c.h.b16 %v672
        %v1193 = vunpack.c.l.b16 %v673
        %v1194 = vunpack.c.h.b16 %v673
        %v1195 = vunpack.c.l.b16 %v674
        %v1196 = vunpack.c.h.b16 %v674
        %v1197 = vunpack.c.l.b16 %v675
        %v1198 = vunpack.c.h.b16 %v675
        %v1199 = vunpack.c.l.b16 %v676
        %v1200 = vunpack.c.h.b16 %v676
        %v1201 = vunpack.c.l.b16 %v677
        %v1202 = vunpack.c.h.b16 %v677
        %v1203 = vunpack.c.l.b16 %v678
        %v1204 = vunpack.c.h.b16 %v678
        %v1205 = vunpack.c.l.b16 %v679
        %v1206 = vunpack.c.h.b16 %v679
        %v1207 = vunpack.c.l.b16 %v680
        %v1208 = vunpack.c.h.b16 %v680
        %v1209 = vunpack.c.l.b16 %v681
        %v1210 = vunpack.c.h.b16 %v681
        %v1211 = vunpack.c.l.b16 %v682
        %v1212 = vunpack.c.h.b16 %v682
        %v1213 = vunpack.c.l.b16 %v683
        %v1214 = vunpack.c.h.b16 %v683
        %v1215 = vunpack.c.l.b16 %v684
        %v1216 = vunpack.c.h.b16 %v684
        %v1217 = vunpack.c.l.b16 %v685
        %v1218 = vunpack.c.h.b16 %v685
        %v1219 = vunpack.c.l.b16 %v686
        %v1220 = vunpack.c.h.b16 %v686
        %v1221 = vunpack.c.l.b16 %v687
        %v1222 = vunpack.c.h.b16 %v687
        %v1223 = vunpack.c.l.b16 %v688
        %v1224 = vunpack.c.h.b16 %v688
        %v1225 = vunpack.c.l.b16 %v689
        %v1226 = vunpack.c.h.b16 %v689
        %v1227 = vunpack.c.l.b16 %v690
        %v1228 = vunpack.c.h.b16 %v690
        %v1229 = vunpack.c.l.b16 %v691
        %v1230 = vunpack.c.h.b16 %v691
        %v1231 = vunpack.c.l.b16 %v692
        %v1232 = vunpack.c.h.b16 %v692
        %v1233 = vunpack.c.l.b16 %v693
        %v1234 = vunpack.c.h.b16 %v693
        %v1235 = vunpack.c.l.b16 %v694
        %v1236 = vunpack.c.h.b16 %v694
        %v1237 = vunpack.c.l.b16 %v695
        %v1238 = vunpack.c.h.b16 %v695
        %v1239 = vunpack.c.l.b16 %v696
        %v1240 = vunpack.c.h.b16 %v696
        %v1241 = vunpack.c.l.b16 %v697
        %v1242 = vunpack.c.h.b16 %v697
        %v1243 = vunpack.c.l.b16 %v698
        %v1244 = vunpack.c.h.b16 %v698
        %v1245 = vunpack.c.l.b16 %v699
        %v1246 = vunpack.c.h.b16 %v699
        %v1247 = vunpack.c.l.b16 %v700
        %v1248 = vunpack.c.h.b16 %v700
        %v1249 = vunpack.c.l.b16 %v701
        %v1250 = vunpack.c.h.b16 %v701
        %v1251 = vunpack.c.l.b16 %v702
        %v1252 = vunpack.c.h.b16 %v702
        %v1253 = vunpack.c.l.b16 %v703
        %v1254 = vunpack.c.h.b16 %v703
        %v1255 = vunpack.c.l.b16 %v704
        %v1256 = vunpack.c.h.b16 %v704
        %v1257 = vunpack.c.l.b16 %v705
        %v1258 = vunpack.c.h.b16 %v705
        %v1259 = vunpack.c.l.b16 %v706
        %v1260 = vunpack.c.h.b16 %v706
        %v1261 = vunpack.c.l.b16 %v707
        %v1262 = vunpack.c.h.b16 %v707
        %v1263 = vunpack.c.l.b16 %v708
        %v1264 = vunpack.c.h.b16 %v708
        %v1265 = vunpack.c.l.b16 %v709
        %v1266 = vunpack.c.h.b16 %v709
        %v1267 = vunpack.c.l.b16 %v710
        %v1268 = vunpack.c.h.b16 %v710
        %v1269 = vunpack.c.l.b16 %v711
        %v1270 = vunpack.c.h.b16 %v711
        %v1271 = vunpack.c.l.b16 %v712
        %v1272 = vunpack.c.h.b16 %v712
        %v1273 = vunpack.c.l.b16 %v713
        %v1274 = vunpack.c.h.b16 %v713
        %v1275 = vunpack.c.l.b16 %v714
        %v1276 = vunpack.c.h.b16 %v714
        %v1277 = vunpack.c.l.b16 %v715
        %v1278 = vunpack.c.h.b16 %v715
        %v1279 = vunpack.c.l.b16 %v716
        %v1280 = vunpack.c.h.b16 %v716
        %v1281 = vunpack.c.l.b16 %v717
        %v1282 = vunpack.c.h.b16 %v717
        %v1283 = vunpack.c.l.b16 %v718
        %v1284 = vunpack.c.h.b16 %v718
        %v1285 = vunpack.c.l.b16 %v719
        %v1286 = vunpack.c.h.b16 %v719
        %v1287 = vunpack.c.l.b16 %v720
        %v1288 = vunpack.c.h.b16 %v720
        %v1289 = vunpack.c.l.b16 %v721
        %v1290 = vunpack.c.h.b16 %v721
        %v1291 = vunpack.c.l.b16 %v722
        %v1292 = vunpack.c.h.b16 %v722
        %v1293 = vunpack.c.l.b16 %v723
        %v1294 = vunpack.c.h.b16 %v723
        %v1295 = vunpack.c.l.b16 %v724
        %v1296 = vunpack.c.h.b16 %v724
        %v1297 = vunpack.c.l.b16 %v725
        %v1298 = vunpack.c.h.b16 %v725
        %v1299 = vunpack.c.l.b16 %v726
        %v1300 = vunpack.c.h.b16 %v726
        %v1301 = vunpack.c.l.b16 %v727
        %v1302 = vunpack.c.h.b16 %v727
        %v1303 = vunpack.c.l.b16 %v728
        %v1304 = vunpack.c.h.b16 %v728
        %v1305 = vunpack.c.l.b16 %v729
        %v1306 = vunpack.c.h.b16 %v729
        %v1307 = vunpack.c.l.b16 %v730
        %v1308 = vunpack.c.h.b16 %v730
        %v1309 = vunpack.c.l.b16 %v731
        %v1310 = vunpack.c.h.b16 %v731
        %v1311 = vunpack.c.l.b16 %v732
        %v1312 = vunpack.c.h.b16 %v732
        %v1313 = vunpack.c.l.b16 %v733
        %v1314 = vunpack.c.h.b16 %v733
        %v1315 = vunpack.c.l.b16 %v734
        %v1316 = vunpack.c.h.b16 %v734
        %v1317 = vunpack.c.l.b16 %v735
        %v1318 = vunpack.c.h.b16 %v735
        %v1319 = vunpack.c.l.b16 %v736
        %v1320 = vunpack.c.h.b16 %v736
        %v1321 = vunpack.c.l.b16 %v737
        %v1322 = vunpack.c.h.b16 %v737
        %v1323 = vunpack.c.l.b16 %v738
        %v1324 = vunpack.c.h.b16 %v738
        %v1325 = vunpack.c.l.b16 %v739
        %v1326 = vunpack.c.h.b16 %v739
        %v1327 = vunpack.c.l.b16 %v740
        %v1328 = vunpack.c.h.b16 %v740
        %v1329 = vunpack.c.l.b16 %v741
        %v1330 = vunpack.c.h.b16 %v741
        %v1331 = vunpack.c.l.b16 %v742
        %v1332 = vunpack.c.h.b16 %v742
        %v1333 = vunpack.c.l.b16 %v743
        %v1334 = vunpack.c.h.b16 %v743
        %v1335 = vunpack.c.l.b16 %v744
        %v1336 = vunpack.c.h.b16 %v744
        %v1337 = vunpack.c.l.b16 %v745
        %v1338 = vunpack.c.h.b16 %v745
        %v1339 = vunpack.c.l.b16 %v746
        %v1340 = vunpack.c.h.b16 %v746
        %v1341 = vunpack.c.l.b16 %v747
        %v1342 = vunpack.c.h.b16 %v747
        %v1343 = vunpack.c.l.b16 %v748
        %v1344 = vunpack.c.h.b16 %v748
        %v1345 = vunpack.c.l.b16 %v749
        %v1346 = vunpack.c.h.b16 %v749
        %v1347 = vunpack.c.l.b16 %v750
        %v1348 = vunpack.c.h.b16 %v750
        %v1349 = vpack.c.b16 %v969, %v965
        %v1350 = vpack.c.b16 %v970, %v966
        %v1351 = vpack.c.b16 %v971, %v967
        %v1352 = vpack.c.b16 %v972, %v968
        %v1353 = vpack.c.b16 %v977, %v973
        %v1354 = vpack.c.b16 %v978, %v974
        %v1355 = vpack.c.b16 %v979, %v975
        %v1356 = vpack.c.b16 %v980, %v976
        %v1357 = vpack.c.b16 %v985, %v981
        %v1358 = vpack.c.b16 %v986, %v982
        %v1359 = vpack.c.b16 %v987, %v983
        %v1360 = vpack.c.b16 %v988, %v984
        %v1361 = vpack.c.b16 %v993, %v989
        %v1362 = vpack.c.b16 %v994, %v990
        %v1363 = vpack.c.b16 %v995, %v991
        %v1364 = vpack.c.b16 %v996, %v992
        %v1365 = vpack.c.b16 %v1001, %v997
        %v1366 = vpack.c.b16 %v1002, %v998
        %v1367 = vpack.c.b16 %v1003, %v999
        %v1368 = vpack.c.b16 %v1004, %v1000
        %v1369 = vpack.c.b16 %v1009, %v1005
        %v1370 = vpack.c.b16 %v1010, %v1006
        %v1371 = vpack.c.b16 %v1011, %v1007
        %v1372 = vpack.c.b16 %v1012, %v1008
        %v1373 = vpack.c.b16 %v1017, %v1013
        %v1374 = vpack.c.b16 %v1018, %v1014
        %v1375 = vpack.c.b16 %v1019, %v1015
        %v1376 = vpack.c.b16 %v1020, %v1016
        %v1377 = vpack.c.b16 %v1025, %v1021
        %v1378 = vpack.c.b16 %v1026, %v1022
        %v1379 = vpack.c.b16 %v1027, %v1023
        %v1380 = vpack.c.b16 %v1028, %v1024
        %v1381 = vpack.c.b16 %v1033, %v1029
        %v1382 = vpack.c.b16 %v1034, %v1030
        %v1383 = vpack.c.b16 %v1035, %v1031
        %v1384 = vpack.c.b16 %v1036, %v1032
        %v1385 = vpack.c.b16 %v1041, %v1037
        %v1386 = vpack.c.b16 %v1042, %v1038
        %v1387 = vpack.c.b16 %v1043, %v1039
        %v1388 = vpack.c.b16 %v1044, %v1040
        %v1389 = vpack.c.b16 %v1049, %v1045
        %v1390 = vpack.c.b16 %v1050, %v1046
        %v1391 = vpack.c.b16 %v1051, %v1047
        %v1392 = vpack.c.b16 %v1052, %v1048
        %v1393 = vpack.c.b16 %v1057, %v1053
        %v1394 = vpack.c.b16 %v1058, %v1054
        %v1395 = vpack.c.b16 %v1059, %v1055
        %v1396 = vpack.c.b16 %v1060, %v1056
        %v1397 = vpack.c.b16 %v1065, %v1061
        %v1398 = vpack.c.b16 %v1066, %v1062
        %v1399 = vpack.c.b16 %v1067, %v1063
        %v1400 = vpack.c.b16 %v1068, %v1064
        %v1401 = vpack.c.b16 %v1073, %v1069
        %v1402 = vpack.c.b16 %v1074, %v1070
        %v1403 = vpack.c.b16 %v1075, %v1071
        %v1404 = vpack.c.b16 %v1076, %v1072
        %v1405 = vpack.c.b16 %v1081, %v1077
        %v1406 = vpack.c.b16 %v1082, %v1078
        %v1407 = vpack.c.b16 %v1083, %v1079
        %v1408 = vpack.c.b16 %v1084, %v1080
        %v1409 = vpack.c.b16 %v1089, %v1085
        %v1410 = vpack.c.b16 %v1090, %v1086
        %v1411 = vpack.c.b16 %v1091, %v1087
        %v1412 = vpack.c.b16 %v1092, %v1088
        %v1413 = vpack.c.b16 %v1097, %v1093
        %v1414 = vpack.c.b16 %v1098, %v1094
        %v1415 = vpack.c.b16 %v1099, %v1095
        %v1416 = vpack.c.b16 %v1100, %v1096
        %v1417 = vpack.c.b16 %v1105, %v1101
        %v1418 = vpack.c.b16 %v1106, %v1102
        %v1419 = vpack.c.b16 %v1107, %v1103
        %v1420 = vpack.c.b16 %v1108, %v1104
        %v1421 = vpack.c.b16 %v1113, %v1109
        %v1422 = vpack.c.b16 %v1114, %v1110
        %v1423 = vpack.c.b16 %v1115, %v1111
        %v1424 = vpack.c.b16 %v1116, %v1112
        %v1425 = vpack.c.b16 %v1121, %v1117
        %v1426 = vpack.c.b16 %v1122, %v1118
        %v1427 = vpack.c.b16 %v1123, %v1119
        %v1428 = vpack.c.b16 %v1124, %v1120
        %v1429 = vpack.c.b16 %v1129, %v1125
        %v1430 = vpack.c.b16 %v1130, %v1126
        %v1431 = vpack.c.b16 %v1131, %v1127
        %v1432 = vpack.c.b16 %v1132, %v1128
        %v1433 = vpack.c.b16 %v1137, %v1133
        %v1434 = vpack.c.b16 %v1138, %v1134
        %v1435 = vpack.c.b16 %v1139, %v1135
        %v1436 = vpack.c.b16 %v1140, %v1136
        %v1437 = vpack.c.b16 %v1145, %v1141
        %v1438 = vpack.c.b16 %v1146, %v1142
        %v1439 = vpack.c.b16 %v1147, %v1143
        %v1440 = vpack.c.b16 %v1148, %v1144
        %v1441 = vpack.c.b16 %v1153, %v1149
        %v1442 = vpack.c.b16 %v1154, %v1150
        %v1443 = vpack.c.b16 %v1155, %v1151
        %v1444 = vpack.c.b16 %v1156, %v1152
        %v1445 = vpack.c.b16 %v1161, %v1157
        %v1446 = vpack.c.b16 %v1162, %v1158
        %v1447 = vpack.c.b16 %v1163, %v1159
        %v1448 = vpack.c.b16 %v1164, %v1160
        %v1449 = vpack.c.b16 %v1169, %v1165
        %v1450 = vpack.c.b16 %v1170, %v1166
        %v1451 = vpack.c.b16 %v1171, %v1167
        %v1452 = vpack.c.b16 %v1172, %v1168
        %v1453 = vpack.c.b16 %v1177, %v1173
        %v1454 = vpack.c.b16 %v1178, %v1174
        %v1455 = vpack.c.b16 %v1179, %v1175
        %v1456 = vpack.c.b16 %v1180, %v1176
        %v1457 = vpack.c.b16 %v1185, %v1181
        %v1458 = vpack.c.b16 %v1186, %v1182
        %v1459 = vpack.c.b16 %v1187, %v1183
        %v1460 = vpack.c.b16 %v1188, %v1184
        %v1461 = vpack.c.b16 %v1193, %v1189
        %v1462 = vpack.c.b16 %v1194, %v1190
        %v1463 = vpack.c.b16 %v1195, %v1191
        %v1464 = vpack.c.b16 %v1196, %v1192
        %v1465 = vpack.c.b16 %v1201, %v1197
        %v1466 = vpack.c.b16 %v1202, %v1198
        %v1467 = vpack.c.b16 %v1203, %v1199
        %v1468 = vpack.c.b16 %v1204, %v1200
        %v1469 = vpack.c.b16 %v1209, %v1205
        %v1470 = vpack.c.b16 %v1210, %v1206
        %v1471 = vpack.c.b16 %v1211, %v1207
        %v1472 = vpack.c.b16 %v1212, %v1208
        %v1473 = vpack.c.b16 %v1217, %v1213
        %v1474 = vpack.c.b16 %v1218, %v1214
        %v1475 = vpack.c.b16 %v1219, %v1215
        %v1476 = vpack.c.b16 %v1220, %v1216
        %v1477 = vpack.c.b16 %v1225, %v1221
        %v1478 = vpack.c.b16 %v1226, %v1222
        %v1479 = vpack.c.b16 %v1227, %v1223
        %v1480 = vpack.c.b16 %v1228, %v1224
        %v1481 = vpack.c.b16 %v1233, %v1229
        %v1482 = vpack.c.b16 %v1234, %v1230
        %v1483 = vpack.c.b16 %v1235, %v1231
        %v1484 = vpack.c.b16 %v1236, %v1232
        %v1485 = vpack.c.b16 %v1241, %v1237
        %v1486 = vpack.c.b16 %v1242, %v1238
        %v1487 = vpack.c.b16 %v1243, %v1239
        %v1488 = vpack.c.b16 %v1244, %v1240
        %v1489 = vpack.c.b16 %v1249, %v1245
        %v1490 = vpack.c.b16 %v1250, %v1246
        %v1491 = vpack.c.b16 %v1251, %v1247
        %v1492 = vpack.c.b16 %v1252, %v1248
        %v1493 = vpack.c.b16 %v1257, %v1253
        %v1494 = vpack.c.b16 %v1258, %v1254
        %v1495 = vpack.c.b16 %v1259, %v1255
        %v1496 = vpack.c.b16 %v1260, %v1256
        %v1497 = vpack.c.b16 %v1265, %v1261
        %v1498 = vpack.c.b16 %v1266, %v1262
        %v1499 = vpack.c.b16 %v1267, %v1263
        %v1500 = vpack.c.b16 %v1268, %v1264
        %v1501 = vpack.c.b16 %v1273, %v1269
        %v1502 = vpack.c.b16 %v1274, %v1270
        %v1503 = vpack.c.b16 %v1275, %v1271
        %v1504 = vpack.c.b16 %v1276, %v1272
        %v1505 = vpack.c.b16 %v1281, %v1277
        %v1506 = vpack.c.b16 %v1282, %v1278
        %v1507 = vpack.c.b16 %v1283, %v1279
        %v1508 = vpack.c.b16 %v1284, %v1280
        %v1509 = vpack.c.b16 %v1289, %v1285
        %v1510 = vpack.c.b16 %v1290, %v1286
        %v1511 = vpack.c.b16 %v1291, %v1287
        %v1512 = vpack.c.b16 %v1292, %v1288
        %v1513 = vpack.c.b16 %v1297, %v1293
        %v1514 = vpack.c.b16 %v1298, %v1294
        %v1515 = vpack.c.b16 %v1299, %v1295
        %v1516 = vpack.c.b16 %v1300, %v1296
        %v1517 = vpack.c.b16 %v1305, %v1301
        %v1518 = vpack.c.b16 %v1306, %v1302
        %v1519 = vpack.c.b16 %v1307, %v1303
        %v1520 = vpack.c.b16 %v1308, %v1304
        %v1521 = vpack.c.b16 %v1313, %v1309
        %v1522 = vpack.c.b16 %v1314, %v1310
        %v1523 = vpack.c.b16 %v1315, %v1311
        %v1524 = vpack.c.b16 %v1316, %v1312
        %v1525 = vpack.c.b16 %v1321, %v1317
        %v1526 = vpack.c.b16 %v1322, %v1318
        %v1527 = vpack.c.b16 %v1323, %v1319
        %v1528 = vpack.c.b16 %v1324, %v1320
        %v1529 = vpack.c.b16 %v1329, %v1325
        %v1530 = vpack.c.b16 %v1330, %v1326
        %v1531 = vpack.c.b16 %v1331, %v1327
        %v1532 = vpack.c.b16 %v1332, %v1328
        %v1533 = vpack.c.b16 %v1337, %v1333
        %v1534 = vpack.c.b16 %v1338, %v1334
        %v1535 = vpack.c.b16 %v1339, %v1335
        %v1536 = vpack.c.b16 %v1340, %v1336
        %v1537 = vpack.c.b16 %v1345, %v1341
        %v1538 = vpack.c.b16 %v1346, %v1342
        %v1539 = vpack.c.b16 %v1347, %v1343
        %v1540 = vpack.c.b16 %v1348, %v1344
        %1733 = vmatprep.subr.bf16.mxu0 %v1350
        %1734 = vmatpush1.bf16.msra.mxu0 %v1349
        %1735 = vmatprep.subr.bf16.mxu0 %v1354
        %1736 = vmatpush1.bf16.msra.mxu0 %v1353
        %1737 = vmatprep.subr.bf16.mxu0 %v1358
        %1738 = vmatpush1.bf16.msra.mxu0 %v1357
        %1739 = vmatprep.subr.bf16.mxu0 %v1362
        %1740 = vmatpush1.bf16.msra.mxu0 %v1361
        %1741 = vmatprep.subr.bf16.mxu0 %v1366
        %1742 = vmatpush1.bf16.msra.mxu0 %v1365
        %1743 = vmatprep.subr.bf16.mxu0 %v1370
        %1744 = vmatpush1.bf16.msra.mxu0 %v1369
        %1745 = vmatprep.subr.bf16.mxu0 %v1374
        %1746 = vmatpush1.bf16.msra.mxu0 %v1373
        %1747 = vmatprep.subr.bf16.mxu0 %v1378
        %1748 = vmatpush1.bf16.msra.mxu0 %v1377
        %1749 = vmatprep.subr.bf16.mxu0 %v1382
        %1750 = vmatpush1.bf16.msra.mxu0 %v1381
        %1751 = vmatprep.subr.bf16.mxu0 %v1386
        %1752 = vmatpush1.bf16.msra.mxu0 %v1385
        %1753 = vmatprep.subr.bf16.mxu0 %v1390
        %1754 = vmatpush1.bf16.msra.mxu0 %v1389
        %1755 = vmatprep.subr.bf16.mxu0 %v1394
        %1756 = vmatpush1.bf16.msra.mxu0 %v1393
        %1757 = vmatprep.subr.bf16.mxu0 %v1398
        %1758 = vmatpush1.bf16.msra.mxu0 %v1397
        %1759 = vmatprep.subr.bf16.mxu0 %v1402
        %1760 = vmatpush1.bf16.msra.mxu0 %v1401
        %1761 = vmatprep.subr.bf16.mxu0 %v1406
        %1762 = vmatpush1.bf16.msra.mxu0 %v1405
        %1763 = vmatprep.subr.bf16.mxu0 %v1410
        %1764 = vmatpush1.bf16.msra.mxu0 %v1409
        %1765 = vmatprep.mubr.bf16.mxu0 %v554
        %1766 = vmatmul.mubr.bf16.gmra.mrb[0].mxu0 %v553
        %v1767 = vpop.f32.mrb[0].mxu0
        %v1768 = vadd.f32 %v756, %v1767
        %v1769 = vpop.f32.mrb[0].mxu0
        %v1770 = vadd.f32 %v760, %v1769
        %v1771 = vpop.f32.mrb[0].mxu0
        %v1772 = vadd.f32 %v756, %v1771
        %v1773 = vpop.f32.mrb[0].mxu0
        %v1774 = vadd.f32 %v760, %v1773
        %1775 = vdwg.mxu0
        %1776 = vmatprep.subr.bf16.mxu0 %v1414
        %1777 = vmatpush1.bf16.msra.mxu0 %v1413
        %1778 = vmatprep.subr.bf16.mxu0 %v1418
        %1779 = vmatpush1.bf16.msra.mxu0 %v1417
        %1780 = vmatprep.subr.bf16.mxu0 %v1422
        %1781 = vmatpush1.bf16.msra.mxu0 %v1421
        %1782 = vmatprep.subr.bf16.mxu0 %v1426
        %1783 = vmatpush1.bf16.msra.mxu0 %v1425
        %1784 = vmatprep.subr.bf16.mxu0 %v1430
        %1785 = vmatpush1.bf16.msra.mxu0 %v1429
        %1786 = vmatprep.subr.bf16.mxu0 %v1434
        %1787 = vmatpush1.bf16.msra.mxu0 %v1433
        %1788 = vmatprep.subr.bf16.mxu0 %v1438
        %1789 = vmatpush1.bf16.msra.mxu0 %v1437
        %1790 = vmatprep.subr.bf16.mxu0 %v1442
        %1791 = vmatpush1.bf16.msra.mxu0 %v1441
        %1792 = vmatprep.subr.bf16.mxu0 %v1446
        %1793 = vmatpush1.bf16.msra.mxu0 %v1445
        %1794 = vmatprep.subr.bf16.mxu0 %v1450
        %1795 = vmatpush1.bf16.msra.mxu0 %v1449
        %1796 = vmatprep.subr.bf16.mxu0 %v1454
        %1797 = vmatpush1.bf16.msra.mxu0 %v1453
        %1798 = vmatprep.subr.bf16.mxu0 %v1458
        %1799 = vmatpush1.bf16.msra.mxu0 %v1457
        %1800 = vmatprep.subr.bf16.mxu0 %v1462
        %1801 = vmatpush1.bf16.msra.mxu0 %v1461
        %1802 = vmatprep.subr.bf16.mxu0 %v1466
        %1803 = vmatpush1.bf16.msra.mxu0 %v1465
        %1804 = vmatprep.subr.bf16.mxu0 %v1470
        %1805 = vmatpush1.bf16.msra.mxu0 %v1469
        %1806 = vmatprep.subr.bf16.mxu0 %v1474
        %1807 = vmatpush1.bf16.msra.mxu0 %v1473
        %1808 = vmatprep.mubr.bf16.mxu0 %v556
        %1809 = vmatmul.mubr.bf16.gmra.mrb[0].mxu0 %v555
        %v1810 = vpop.f32.mrb[0].mxu0
        %v1811 = vadd.f32 %v1768, %v1810
        %v1812 = vpop.f32.mrb[0].mxu0
        %v1813 = vadd.f32 %v1770, %v1812
        %v1814 = vpop.f32.mrb[0].mxu0
        %v1815 = vadd.f32 %v1772, %v1814
        %v1816 = vpop.f32.mrb[0].mxu0
        %v1817 = vadd.f32 %v1774, %v1816
        %1818 = vdwg.mxu0
        %1819 = vmatprep.subr.bf16.mxu0 %v1478
        %1820 = vmatpush1.bf16.msra.mxu0 %v1477
        %1821 = vmatprep.subr.bf16.mxu0 %v1482
        %1822 = vmatpush1.bf16.msra.mxu0 %v1481
        %1823 = vmatprep.subr.bf16.mxu0 %v1486
        %1824 = vmatpush1.bf16.msra.mxu0 %v1485
        %1825 = vmatprep.subr.bf16.mxu0 %v1490
        %1826 = vmatpush1.bf16.msra.mxu0 %v1489
        %1827 = vmatprep.subr.bf16.mxu0 %v1494
        %1828 = vmatpush1.bf16.msra.mxu0 %v1493
        %1829 = vmatprep.subr.bf16.mxu0 %v1498
        %1830 = vmatpush1.bf16.msra.mxu0 %v1497
        %1831 = vmatprep.subr.bf16.mxu0 %v1502
        %1832 = vmatpush1.bf16.msra.mxu0 %v1501
        %1833 = vmatprep.subr.bf16.mxu0 %v1506
        %1834 = vmatpush1.bf16.msra.mxu0 %v1505
        %1835 = vmatprep.subr.bf16.mxu0 %v1510
        %1836 = vmatpush1.bf16.msra.mxu0 %v1509
        %1837 = vmatprep.subr.bf16.mxu0 %v1514
        %1838 = vmatpush1.bf16.msra.mxu0 %v1513
        %1839 = vmatprep.subr.bf16.mxu0 %v1518
        %1840 = vmatpush1.bf16.msra.mxu0 %v1517
        %1841 = vmatprep.subr.bf16.mxu0 %v1522
        %1842 = vmatpush1.bf16.msra.mxu0 %v1521
        %1843 = vmatprep.subr.bf16.mxu0 %v1526
        %1844 = vmatpush1.bf16.msra.mxu0 %v1525
        %1845 = vmatprep.subr.bf16.mxu0 %v1530
        %1846 = vmatpush1.bf16.msra.mxu0 %v1529
        %1847 = vmatprep.subr.bf16.mxu0 %v1534
        %1848 = vmatpush1.bf16.msra.mxu0 %v1533
        %1849 = vmatprep.subr.bf16.mxu0 %v1538
        %1850 = vmatpush1.bf16.msra.mxu0 %v1537
        %1851 = vmatprep.mubr.bf16.mxu0 %v558
        %1852 = vmatmul.mubr.bf16.gmra.mrb[0].mxu0 %v557
        %v1853 = vpop.f32.mrb[0].mxu0
        %v1854 = vadd.f32 %v1811, %v1853
        %v1855 = vpop.f32.mrb[0].mxu0
        %v1856 = vadd.f32 %v1813, %v1855
        %v1857 = vpop.f32.mrb[0].mxu0
        %v1858 = vadd.f32 %v1815, %v1857
        %v1859 = vpop.f32.mrb[0].mxu0
        %v1860 = vadd.f32 %v1817, %v1859
        %1861 = vdwg.mxu0
        %1862 = vmatprep.subr.bf16.mxu0 %v1352
        %1863 = vmatpush1.bf16.msra.mxu0 %v1351
        %1864 = vmatprep.subr.bf16.mxu0 %v1356
        %1865 = vmatpush1.bf16.msra.mxu0 %v1355
        %1866 = vmatprep.subr.bf16.mxu0 %v1360
        %1867 = vmatpush1.bf16.msra.mxu0 %v1359
        %1868 = vmatprep.subr.bf16.mxu0 %v1364
        %1869 = vmatpush1.bf16.msra.mxu0 %v1363
        %1870 = vmatprep.subr.bf16.mxu0 %v1368
        %1871 = vmatpush1.bf16.msra.mxu0 %v1367
        %1872 = vmatprep.subr.bf16.mxu0 %v1372
        %1873 = vmatpush1.bf16.msra.mxu0 %v1371
        %1874 = vmatprep.subr.bf16.mxu0 %v1376
        %1875 = vmatpush1.bf16.msra.mxu0 %v1375
        %1876 = vmatprep.subr.bf16.mxu0 %v1380
        %1877 = vmatpush1.bf16.msra.mxu0 %v1379
        %1878 = vmatprep.subr.bf16.mxu0 %v1384
        %1879 = vmatpush1.bf16.msra.mxu0 %v1383
        %1880 = vmatprep.subr.bf16.mxu0 %v1388
        %1881 = vmatpush1.bf16.msra.mxu0 %v1387
        %1882 = vmatprep.subr.bf16.mxu0 %v1392
        %1883 = vmatpush1.bf16.msra.mxu0 %v1391
        %1884 = vmatprep.subr.bf16.mxu0 %v1396
        %1885 = vmatpush1.bf16.msra.mxu0 %v1395
        %1886 = vmatprep.subr.bf16.mxu0 %v1400
        %1887 = vmatpush1.bf16.msra.mxu0 %v1399
        %1888 = vmatprep.subr.bf16.mxu0 %v1404
        %1889 = vmatpush1.bf16.msra.mxu0 %v1403
        %1890 = vmatprep.subr.bf16.mxu0 %v1408
        %1891 = vmatpush1.bf16.msra.mxu0 %v1407
        %1892 = vmatprep.subr.bf16.mxu0 %v1412
        %1893 = vmatpush1.bf16.msra.mxu0 %v1411
        %1894 = vmatprep.mubr.bf16.mxu0 %v554
        %1895 = vmatmul.mubr.bf16.gmra.mrb[0].mxu0 %v553
        %v1896 = vpop.f32.mrb[0].mxu0
        %v1897 = vadd.f32 %v764, %v1896
        %v1898 = vpop.f32.mrb[0].mxu0
        %v1899 = vadd.f32 %v768, %v1898
        %v1900 = vpop.f32.mrb[0].mxu0
        %v1901 = vadd.f32 %v764, %v1900
        %v1902 = vpop.f32.mrb[0].mxu0
        %v1903 = vadd.f32 %v768, %v1902
        %1904 = vdwg.mxu0
        %1905 = vmatprep.subr.bf16.mxu0 %v1416
        %1906 = vmatpush1.bf16.msra.mxu0 %v1415
        %1907 = vmatprep.subr.bf16.mxu0 %v1420
        %1908 = vmatpush1.bf16.msra.mxu0 %v1419
        %1909 = vmatprep.subr.bf16.mxu0 %v1424
        %1910 = vmatpush1.bf16.msra.mxu0 %v1423
        %1911 = vmatprep.subr.bf16.mxu0 %v1428
        %1912 = vmatpush1.bf16.msra.mxu0 %v1427
        %1913 = vmatprep.subr.bf16.mxu0 %v1432
        %1914 = vmatpush1.bf16.msra.mxu0 %v1431
        %1915 = vmatprep.subr.bf16.mxu0 %v1436
        %1916 = vmatpush1.bf16.msra.mxu0 %v1435
        %1917 = vmatprep.subr.bf16.mxu0 %v1440
        %1918 = vmatpush1.bf16.msra.mxu0 %v1439
        %1919 = vmatprep.subr.bf16.mxu0 %v1444
        %1920 = vmatpush1.bf16.msra.mxu0 %v1443
        %1921 = vmatprep.subr.bf16.mxu0 %v1448
        %1922 = vmatpush1.bf16.msra.mxu0 %v1447
        %1923 = vmatprep.subr.bf16.mxu0 %v1452
        %1924 = vmatpush1.bf16.msra.mxu0 %v1451
        %1925 = vmatprep.subr.bf16.mxu0 %v1456
        %1926 = vmatpush1.bf16.msra.mxu0 %v1455
        %1927 = vmatprep.subr.bf16.mxu0 %v1460
        %1928 = vmatpush1.bf16.msra.mxu0 %v1459
        %1929 = vmatprep.subr.bf16.mxu0 %v1464
        %1930 = vmatpush1.bf16.msra.mxu0 %v1463
        %1931 = vmatprep.subr.bf16.mxu0 %v1468
        %1932 = vmatpush1.bf16.msra.mxu0 %v1467
        %1933 = vmatprep.subr.bf16.mxu0 %v1472
        %1934 = vmatpush1.bf16.msra.mxu0 %v1471
        %1935 = vmatprep.subr.bf16.mxu0 %v1476
        %1936 = vmatpush1.bf16.msra.mxu0 %v1475
        %1937 = vmatprep.mubr.bf16.mxu0 %v556
        %1938 = vmatmul.mubr.bf16.gmra.mrb[0].mxu0 %v555
        %v1939 = vpop.f32.mrb[0].mxu0
        %v1940 = vadd.f32 %v1897, %v1939
        %v1941 = vpop.f32.mrb[0].mxu0
        %v1942 = vadd.f32 %v1899, %v1941
        %v1943 = vpop.f32.mrb[0].mxu0
        %v1944 = vadd.f32 %v1901, %v1943
        %v1945 = vpop.f32.mrb[0].mxu0
        %v1946 = vadd.f32 %v1903, %v1945
        %1947 = vdwg.mxu0
        %1948 = vmatprep.subr.bf16.mxu0 %v1480
        %1949 = vmatpush1.bf16.msra.mxu0 %v1479
        %1950 = vmatprep.subr.bf16.mxu0 %v1484
        %1951 = vmatpush1.bf16.msra.mxu0 %v1483
        %1952 = vmatprep.subr.bf16.mxu0 %v1488
        %1953 = vmatpush1.bf16.msra.mxu0 %v1487
        %1954 = vmatprep.subr.bf16.mxu0 %v1492
        %1955 = vmatpush1.bf16.msra.mxu0 %v1491
        %1956 = vmatprep.subr.bf16.mxu0 %v1496
        %1957 = vmatpush1.bf16.msra.mxu0 %v1495
        %1958 = vmatprep.subr.bf16.mxu0 %v1500
        %1959 = vmatpush1.bf16.msra.mxu0 %v1499
        %1960 = vmatprep.subr.bf16.mxu0 %v1504
        %1961 = vmatpush1.bf16.msra.mxu0 %v1503
        %1962 = vmatprep.subr.bf16.mxu0 %v1508
        %1963 = vmatpush1.bf16.msra.mxu0 %v1507
        %1964 = vmatprep.subr.bf16.mxu0 %v1512
        %1965 = vmatpush1.bf16.msra.mxu0 %v1511
        %1966 = vmatprep.subr.bf16.mxu0 %v1516
        %1967 = vmatpush1.bf16.msra.mxu0 %v1515
        %1968 = vmatprep.subr.bf16.mxu0 %v1520
        %1969 = vmatpush1.bf16.msra.mxu0 %v1519
        %1970 = vmatprep.subr.bf16.mxu0 %v1524
        %1971 = vmatpush1.bf16.msra.mxu0 %v1523
        %1972 = vmatprep.subr.bf16.mxu0 %v1528
        %1973 = vmatpush1.bf16.msra.mxu0 %v1527
        %1974 = vmatprep.subr.bf16.mxu0 %v1532
        %1975 = vmatpush1.bf16.msra.mxu0 %v1531
        %1976 = vmatprep.subr.bf16.mxu0 %v1536
        %1977 = vmatpush1.bf16.msra.mxu0 %v1535
        %1978 = vmatprep.subr.bf16.mxu0 %v1540
        %1979 = vmatpush1.bf16.msra.mxu0 %v1539
        %1980 = vmatprep.mubr.bf16.mxu0 %v558
        %1981 = vmatmul.mubr.bf16.gmra.mrb[0].mxu0 %v557
        %v1982 = vpop.f32.mrb[0].mxu0
        %v1983 = vadd.f32 %v1940, %v1982
        %v1984 = vpop.f32.mrb[0].mxu0
        %v1985 = vadd.f32 %v1942, %v1984
        %v1986 = vpop.f32.mrb[0].mxu0
        %v1987 = vadd.f32 %v1944, %v1986
        %v1988 = vpop.f32.mrb[0].mxu0
        %v1989 = vadd.f32 %v1946, %v1988
        %1990 = vdwg.mxu0
        %v1991 = vmul.f32 %v1854, 0.5
        %v1992 = vmul.f32 %v1856, 0.5
        %v1993 = vmul.f32 %v1983, 0.5
        %v1994 = vmul.f32 %v1985, 0.5
        %v1995 = vmul.f32 %v1858, 0.5
        %v1996 = vmul.f32 %v1860, 0.5
        %v1997 = vmul.f32 %v1987, 0.5
        %v1998 = vmul.f32 %v1989, 0.5
        %v1999 = vmul.f32 %v1854, 0.70710677
        %v2000 = vmul.f32 %v1856, 0.70710677
        %v2001 = vmul.f32 %v1983, 0.70710677
        %v2002 = vmul.f32 %v1985, 0.70710677
        %v2003 = vmul.f32 %v1858, 0.70710677
        %v2004 = vmul.f32 %v1860, 0.70710677
        %v2005 = vmul.f32 %v1987, 0.70710677
        %v2006 = vmul.f32 %v1989, 0.70710677
        %v2007 = verf.f32.pop %v1999
        %v2008 = verf.f32.pop %v2000
        %v2009 = verf.f32.pop %v2001
        %v2010 = verf.f32.pop %v2002
        %v2011 = verf.f32.pop %v2003
        %v2012 = verf.f32.pop %v2004
        %v2013 = verf.f32.pop %v2005
        %v2014 = verf.f32.pop %v2006
        %v2015 = vadd.f32 %v2007, 1.0
        %v2016 = vadd.f32 %v2008, 1.0
        %v2017 = vadd.f32 %v2009, 1.0
        %v2018 = vadd.f32 %v2010, 1.0
        %v2019 = vadd.f32 %v2011, 1.0
        %v2020 = vadd.f32 %v2012, 1.0
        %v2021 = vadd.f32 %v2013, 1.0
        %v2022 = vadd.f32 %v2014, 1.0
        %v2023 = vmul.f32 %v1991, %v2015
        %v2024 = vmul.f32 %v1992, %v2016
        %v2025 = vmul.f32 %v1993, %v2017
        %v2026 = vmul.f32 %v1994, %v2018
        %v2027 = vmul.f32 %v1995, %v2019
        %v2028 = vmul.f32 %v1996, %v2020
        %v2029 = vmul.f32 %v1997, %v2021
        %v2030 = vmul.f32 %v1998, %v2022
        %v2031 = vpack.c.bf16 %v2027, %v2023
        %v2032 = vpack.c.bf16 %v2028, %v2024
        %v2033 = vpack.c.bf16 %v2029, %v2025
        %v2034 = vpack.c.bf16 %v2030, %v2026
        %v2035 = vld [vmem:[%s451] sm:$0xff]
        %v2036 = vld [vmem:[%s451 + $0x8] sm:$0xff]
        %v2037 = vld [vmem:[%s451 + $0x10] sm:$0xff]
        %v2038 = vld [vmem:[%s451 + $0x18] sm:$0xff]
        %v2039 = vld [vmem:[%s451 + $0x20] sm:$0xff]
        %v2040 = vld [vmem:[%s451 + $0x28] sm:$0xff]
        %v2041 = vld [vmem:[%s451 + $0x30] sm:$0xff]
        %v2042 = vld [vmem:[%s451 + $0x38] sm:$0xff]
        %v2043 = vld [vmem:[%s451 + $0x40] sm:$0xff]
        %v2044 = vld [vmem:[%s451 + $0x48] sm:$0xff]
        %v2045 = vld [vmem:[%s451 + $0x50] sm:$0xff]
        %v2046 = vld [vmem:[%s451 + $0x58] sm:$0xff]
        %v2047 = vld [vmem:[%s451 + $0x60] sm:$0xff]
        %v2048 = vld [vmem:[%s451 + $0x68] sm:$0xff]
        %v2049 = vld [vmem:[%s451 + $0x70] sm:$0xff]
        %v2050 = vld [vmem:[%s451 + $0x78] sm:$0xff]
        %v2051 = vld [vmem:[%s451 + $0x80] sm:$0xff]
        %v2052 = vld [vmem:[%s451 + $0x88] sm:$0xff]
        %v2053 = vld [vmem:[%s451 + $0x90] sm:$0xff]
        %v2054 = vld [vmem:[%s451 + $0x98] sm:$0xff]
        %v2055 = vld [vmem:[%s451 + $0xa0] sm:$0xff]
        %v2056 = vld [vmem:[%s451 + $0xa8] sm:$0xff]
        %v2057 = vld [vmem:[%s451 + $0xb0] sm:$0xff]
        %v2058 = vld [vmem:[%s451 + $0xb8] sm:$0xff]
        %v2059 = vld [vmem:[%s451 + $0xc0] sm:$0xff]
        %v2060 = vld [vmem:[%s451 + $0xc8] sm:$0xff]
        %v2061 = vld [vmem:[%s451 + $0xd0] sm:$0xff]
        %v2062 = vld [vmem:[%s451 + $0xd8] sm:$0xff]
        %v2063 = vld [vmem:[%s451 + $0xe0] sm:$0xff]
        %v2064 = vld [vmem:[%s451 + $0xe8] sm:$0xff]
        %v2065 = vld [vmem:[%s451 + $0xf0] sm:$0xff]
        %v2066 = vld [vmem:[%s451 + $0xf8] sm:$0xff]
        %v2067 = vld [vmem:[%s451 + $0x100] sm:$0xff]
        %v2068 = vld [vmem:[%s451 + $0x108] sm:$0xff]
        %v2069 = vld [vmem:[%s451 + $0x110] sm:$0xff]
        %v2070 = vld [vmem:[%s451 + $0x118] sm:$0xff]
        %v2071 = vld [vmem:[%s451 + $0x120] sm:$0xff]
        %v2072 = vld [vmem:[%s451 + $0x128] sm:$0xff]
        %v2073 = vld [vmem:[%s451 + $0x130] sm:$0xff]
        %v2074 = vld [vmem:[%s451 + $0x138] sm:$0xff]
        %v2075 = vld [vmem:[%s451 + $0x140] sm:$0xff]
        %v2076 = vld [vmem:[%s451 + $0x148] sm:$0xff]
        %v2077 = vld [vmem:[%s451 + $0x150] sm:$0xff]
        %v2078 = vld [vmem:[%s451 + $0x158] sm:$0xff]
        %v2079 = vld [vmem:[%s451 + $0x160] sm:$0xff]
        %v2080 = vld [vmem:[%s451 + $0x168] sm:$0xff]
        %v2081 = vld [vmem:[%s451 + $0x170] sm:$0xff]
        %v2082 = vld [vmem:[%s451 + $0x178] sm:$0xff]
        %v2083 = vld [vmem:[%s451 + $0x180] sm:$0xff]
        %v2084 = vld [vmem:[%s451 + $0x188] sm:$0xff]
        %v2085 = vld [vmem:[%s451 + $0x190] sm:$0xff]
        %v2086 = vld [vmem:[%s451 + $0x198] sm:$0xff]
        %v2087 = vld [vmem:[%s451 + $0x1a0] sm:$0xff]
        %v2088 = vld [vmem:[%s451 + $0x1a8] sm:$0xff]
        %v2089 = vld [vmem:[%s451 + $0x1b0] sm:$0xff]
        %v2090 = vld [vmem:[%s451 + $0x1b8] sm:$0xff]
        %v2091 = vld [vmem:[%s451 + $0x1c0] sm:$0xff]
        %v2092 = vld [vmem:[%s451 + $0x1c8] sm:$0xff]
        %v2093 = vld [vmem:[%s451 + $0x1d0] sm:$0xff]
        %v2094 = vld [vmem:[%s451 + $0x1d8] sm:$0xff]
        %v2095 = vld [vmem:[%s451 + $0x1e0] sm:$0xff]
        %v2096 = vld [vmem:[%s451 + $0x1e8] sm:$0xff]
        %v2097 = vld [vmem:[%s451 + $0x1f0] sm:$0xff]
        %v2098 = vld [vmem:[%s451 + $0x1f8] sm:$0xff]
        %v2099 = vld [vmem:[%s451 + $0x200] sm:$0xff]
        %v2100 = vld [vmem:[%s451 + $0x208] sm:$0xff]
        %v2101 = vld [vmem:[%s451 + $0x210] sm:$0xff]
        %v2102 = vld [vmem:[%s451 + $0x218] sm:$0xff]
        %v2103 = vld [vmem:[%s451 + $0x220] sm:$0xff]
        %v2104 = vld [vmem:[%s451 + $0x228] sm:$0xff]
        %v2105 = vld [vmem:[%s451 + $0x230] sm:$0xff]
        %v2106 = vld [vmem:[%s451 + $0x238] sm:$0xff]
        %v2107 = vld [vmem:[%s451 + $0x240] sm:$0xff]
        %v2108 = vld [vmem:[%s451 + $0x248] sm:$0xff]
        %v2109 = vld [vmem:[%s451 + $0x250] sm:$0xff]
        %v2110 = vld [vmem:[%s451 + $0x258] sm:$0xff]
        %v2111 = vld [vmem:[%s451 + $0x260] sm:$0xff]
        %v2112 = vld [vmem:[%s451 + $0x268] sm:$0xff]
        %v2113 = vld [vmem:[%s451 + $0x270] sm:$0xff]
        %v2114 = vld [vmem:[%s451 + $0x278] sm:$0xff]
        %v2115 = vld [vmem:[%s451 + $0x280] sm:$0xff]
        %v2116 = vld [vmem:[%s451 + $0x288] sm:$0xff]
        %v2117 = vld [vmem:[%s451 + $0x290] sm:$0xff]
        %v2118 = vld [vmem:[%s451 + $0x298] sm:$0xff]
        %v2119 = vld [vmem:[%s451 + $0x2a0] sm:$0xff]
        %v2120 = vld [vmem:[%s451 + $0x2a8] sm:$0xff]
        %v2121 = vld [vmem:[%s451 + $0x2b0] sm:$0xff]
        %v2122 = vld [vmem:[%s451 + $0x2b8] sm:$0xff]
        %v2123 = vld [vmem:[%s451 + $0x2c0] sm:$0xff]
        %v2124 = vld [vmem:[%s451 + $0x2c8] sm:$0xff]
        %v2125 = vld [vmem:[%s451 + $0x2d0] sm:$0xff]
        %v2126 = vld [vmem:[%s451 + $0x2d8] sm:$0xff]
        %v2127 = vld [vmem:[%s451 + $0x2e0] sm:$0xff]
        %v2128 = vld [vmem:[%s451 + $0x2e8] sm:$0xff]
        %v2129 = vld [vmem:[%s451 + $0x2f0] sm:$0xff]
        %v2130 = vld [vmem:[%s451 + $0x2f8] sm:$0xff]
        %v2131 = vld [vmem:[%s451 + $0x300] sm:$0xff]
        %v2132 = vld [vmem:[%s451 + $0x308] sm:$0xff]
        %v2133 = vld [vmem:[%s451 + $0x310] sm:$0xff]
        %v2134 = vld [vmem:[%s451 + $0x318] sm:$0xff]
        %v2135 = vld [vmem:[%s451 + $0x320] sm:$0xff]
        %v2136 = vld [vmem:[%s451 + $0x328] sm:$0xff]
        %v2137 = vld [vmem:[%s451 + $0x330] sm:$0xff]
        %v2138 = vld [vmem:[%s451 + $0x338] sm:$0xff]
        %v2139 = vld [vmem:[%s451 + $0x340] sm:$0xff]
        %v2140 = vld [vmem:[%s451 + $0x348] sm:$0xff]
        %v2141 = vld [vmem:[%s451 + $0x350] sm:$0xff]
        %v2142 = vld [vmem:[%s451 + $0x358] sm:$0xff]
        %v2143 = vld [vmem:[%s451 + $0x360] sm:$0xff]
        %v2144 = vld [vmem:[%s451 + $0x368] sm:$0xff]
        %v2145 = vld [vmem:[%s451 + $0x370] sm:$0xff]
        %v2146 = vld [vmem:[%s451 + $0x378] sm:$0xff]
        %v2147 = vld [vmem:[%s451 + $0x380] sm:$0xff]
        %v2148 = vld [vmem:[%s451 + $0x388] sm:$0xff]
        %v2149 = vld [vmem:[%s451 + $0x390] sm:$0xff]
        %v2150 = vld [vmem:[%s451 + $0x398] sm:$0xff]
        %v2151 = vld [vmem:[%s451 + $0x3a0] sm:$0xff]
        %v2152 = vld [vmem:[%s451 + $0x3a8] sm:$0xff]
        %v2153 = vld [vmem:[%s451 + $0x3b0] sm:$0xff]
        %v2154 = vld [vmem:[%s451 + $0x3b8] sm:$0xff]
        %v2155 = vld [vmem:[%s451 + $0x3c0] sm:$0xff]
        %v2156 = vld [vmem:[%s451 + $0x3c8] sm:$0xff]
        %v2157 = vld [vmem:[%s451 + $0x3d0] sm:$0xff]
        %v2158 = vld [vmem:[%s451 + $0x3d8] sm:$0xff]
        %v2159 = vld [vmem:[%s451 + $0x3e0] sm:$0xff]
        %v2160 = vld [vmem:[%s451 + $0x3e8] sm:$0xff]
        %v2161 = vld [vmem:[%s451 + $0x3f0] sm:$0xff]
        %v2162 = vld [vmem:[%s451 + $0x3f8] sm:$0xff]
        %v2163 = vld [vmem:[%s460] sm:$0xf]
        %v2165 = vlaneseq
        %v2166 = vshrl.u32 %v2165, 7
        %v2167 = vsub.s32 0, %v2166
        %v2168 = vrot.slane %v2163, %v2167
        %v2169 = vlaneseq
        %v2170 = vshrl.u32 %v2169, 7
        %v2171 = vsub.s32 1, %v2170
        %v2172 = vrot.slane %v2163, %v2171
        %v2173 = vlaneseq
        %v2174 = vshrl.u32 %v2173, 7
        %v2175 = vsub.s32 2, %v2174
        %v2176 = vrot.slane %v2163, %v2175
        %v2177 = vlaneseq
        %v2178 = vshrl.u32 %v2177, 7
        %v2179 = vsub.s32 3, %v2178
        %v2180 = vrot.slane %v2163, %v2179
        %v2313 = vunpack.c.l.b16 %v2035
        %v2314 = vunpack.c.h.b16 %v2035
        %v2315 = vunpack.c.l.b16 %v2036
        %v2316 = vunpack.c.h.b16 %v2036
        %v2317 = vunpack.c.l.b16 %v2037
        %v2318 = vunpack.c.h.b16 %v2037
        %v2319 = vunpack.c.l.b16 %v2038
        %v2320 = vunpack.c.h.b16 %v2038
        %v2321 = vunpack.c.l.b16 %v2039
        %v2322 = vunpack.c.h.b16 %v2039
        %v2323 = vunpack.c.l.b16 %v2040
        %v2324 = vunpack.c.h.b16 %v2040
        %v2325 = vunpack.c.l.b16 %v2041
        %v2326 = vunpack.c.h.b16 %v2041
        %v2327 = vunpack.c.l.b16 %v2042
        %v2328 = vunpack.c.h.b16 %v2042
        %v2329 = vunpack.c.l.b16 %v2043
        %v2330 = vunpack.c.h.b16 %v2043
        %v2331 = vunpack.c.l.b16 %v2044
        %v2332 = vunpack.c.h.b16 %v2044
        %v2333 = vunpack.c.l.b16 %v2045
        %v2334 = vunpack.c.h.b16 %v2045
        %v2335 = vunpack.c.l.b16 %v2046
        %v2336 = vunpack.c.h.b16 %v2046
        %v2337 = vunpack.c.l.b16 %v2047
        %v2338 = vunpack.c.h.b16 %v2047
        %v2339 = vunpack.c.l.b16 %v2048
        %v2340 = vunpack.c.h.b16 %v2048
        %v2341 = vunpack.c.l.b16 %v2049
        %v2342 = vunpack.c.h.b16 %v2049
        %v2343 = vunpack.c.l.b16 %v2050
        %v2344 = vunpack.c.h.b16 %v2050
        %v2345 = vunpack.c.l.b16 %v2051
        %v2346 = vunpack.c.h.b16 %v2051
        %v2347 = vunpack.c.l.b16 %v2052
        %v2348 = vunpack.c.h.b16 %v2052
        %v2349 = vunpack.c.l.b16 %v2053
        %v2350 = vunpack.c.h.b16 %v2053
        %v2351 = vunpack.c.l.b16 %v2054
        %v2352 = vunpack.c.h.b16 %v2054
        %v2353 = vunpack.c.l.b16 %v2055
        %v2354 = vunpack.c.h.b16 %v2055
        %v2355 = vunpack.c.l.b16 %v2056
        %v2356 = vunpack.c.h.b16 %v2056
        %v2357 = vunpack.c.l.b16 %v2057
        %v2358 = vunpack.c.h.b16 %v2057
        %v2359 = vunpack.c.l.b16 %v2058
        %v2360 = vunpack.c.h.b16 %v2058
        %v2361 = vunpack.c.l.b16 %v2059
        %v2362 = vunpack.c.h.b16 %v2059
        %v2363 = vunpack.c.l.b16 %v2060
        %v2364 = vunpack.c.h.b16 %v2060
        %v2365 = vunpack.c.l.b16 %v2061
        %v2366 = vunpack.c.h.b16 %v2061
        %v2367 = vunpack.c.l.b16 %v2062
        %v2368 = vunpack.c.h.b16 %v2062
        %v2369 = vunpack.c.l.b16 %v2063
        %v2370 = vunpack.c.h.b16 %v2063
        %v2371 = vunpack.c.l.b16 %v2064
        %v2372 = vunpack.c.h.b16 %v2064
        %v2373 = vunpack.c.l.b16 %v2065
        %v2374 = vunpack.c.h.b16 %v2065
        %v2375 = vunpack.c.l.b16 %v2066
        %v2376 = vunpack.c.h.b16 %v2066
        %v2377 = vunpack.c.l.b16 %v2067
        %v2378 = vunpack.c.h.b16 %v2067
        %v2379 = vunpack.c.l.b16 %v2068
        %v2380 = vunpack.c.h.b16 %v2068
        %v2381 = vunpack.c.l.b16 %v2069
        %v2382 = vunpack.c.h.b16 %v2069
        %v2383 = vunpack.c.l.b16 %v2070
        %v2384 = vunpack.c.h.b16 %v2070
        %v2385 = vunpack.c.l.b16 %v2071
        %v2386 = vunpack.c.h.b16 %v2071
        %v2387 = vunpack.c.l.b16 %v2072
        %v2388 = vunpack.c.h.b16 %v2072
        %v2389 = vunpack.c.l.b16 %v2073
        %v2390 = vunpack.c.h.b16 %v2073
        %v2391 = vunpack.c.l.b16 %v2074
        %v2392 = vunpack.c.h.b16 %v2074
        %v2393 = vunpack.c.l.b16 %v2075
        %v2394 = vunpack.c.h.b16 %v2075
        %v2395 = vunpack.c.l.b16 %v2076
        %v2396 = vunpack.c.h.b16 %v2076
        %v2397 = vunpack.c.l.b16 %v2077
        %v2398 = vunpack.c.h.b16 %v2077
        %v2399 = vunpack.c.l.b16 %v2078
        %v2400 = vunpack.c.h.b16 %v2078
        %v2401 = vunpack.c.l.b16 %v2079
        %v2402 = vunpack.c.h.b16 %v2079
        %v2403 = vunpack.c.l.b16 %v2080
        %v2404 = vunpack.c.h.b16 %v2080
        %v2405 = vunpack.c.l.b16 %v2081
        %v2406 = vunpack.c.h.b16 %v2081
        %v2407 = vunpack.c.l.b16 %v2082
        %v2408 = vunpack.c.h.b16 %v2082
        %v2409 = vunpack.c.l.b16 %v2083
        %v2410 = vunpack.c.h.b16 %v2083
        %v2411 = vunpack.c.l.b16 %v2084
        %v2412 = vunpack.c.h.b16 %v2084
        %v2413 = vunpack.c.l.b16 %v2085
        %v2414 = vunpack.c.h.b16 %v2085
        %v2415 = vunpack.c.l.b16 %v2086
        %v2416 = vunpack.c.h.b16 %v2086
        %v2417 = vunpack.c.l.b16 %v2087
        %v2418 = vunpack.c.h.b16 %v2087
        %v2419 = vunpack.c.l.b16 %v2088
        %v2420 = vunpack.c.h.b16 %v2088
        %v2421 = vunpack.c.l.b16 %v2089
        %v2422 = vunpack.c.h.b16 %v2089
        %v2423 = vunpack.c.l.b16 %v2090
        %v2424 = vunpack.c.h.b16 %v2090
        %v2425 = vunpack.c.l.b16 %v2091
        %v2426 = vunpack.c.h.b16 %v2091
        %v2427 = vunpack.c.l.b16 %v2092
        %v2428 = vunpack.c.h.b16 %v2092
        %v2429 = vunpack.c.l.b16 %v2093
        %v2430 = vunpack.c.h.b16 %v2093
        %v2431 = vunpack.c.l.b16 %v2094
        %v2432 = vunpack.c.h.b16 %v2094
        %v2433 = vunpack.c.l.b16 %v2095
        %v2434 = vunpack.c.h.b16 %v2095
        %v2435 = vunpack.c.l.b16 %v2096
        %v2436 = vunpack.c.h.b16 %v2096
        %v2437 = vunpack.c.l.b16 %v2097
        %v2438 = vunpack.c.h.b16 %v2097
        %v2439 = vunpack.c.l.b16 %v2098
        %v2440 = vunpack.c.h.b16 %v2098
        %v2441 = vunpack.c.l.b16 %v2099
        %v2442 = vunpack.c.h.b16 %v2099
        %v2443 = vunpack.c.l.b16 %v2100
        %v2444 = vunpack.c.h.b16 %v2100
        %v2445 = vunpack.c.l.b16 %v2101
        %v2446 = vunpack.c.h.b16 %v2101
        %v2447 = vunpack.c.l.b16 %v2102
        %v2448 = vunpack.c.h.b16 %v2102
        %v2449 = vunpack.c.l.b16 %v2103
        %v2450 = vunpack.c.h.b16 %v2103
        %v2451 = vunpack.c.l.b16 %v2104
        %v2452 = vunpack.c.h.b16 %v2104
        %v2453 = vunpack.c.l.b16 %v2105
        %v2454 = vunpack.c.h.b16 %v2105
        %v2455 = vunpack.c.l.b16 %v2106
        %v2456 = vunpack.c.h.b16 %v2106
        %v2457 = vunpack.c.l.b16 %v2107
        %v2458 = vunpack.c.h.b16 %v2107
        %v2459 = vunpack.c.l.b16 %v2108
        %v2460 = vunpack.c.h.b16 %v2108
        %v2461 = vunpack.c.l.b16 %v2109
        %v2462 = vunpack.c.h.b16 %v2109
        %v2463 = vunpack.c.l.b16 %v2110
        %v2464 = vunpack.c.h.b16 %v2110
        %v2465 = vunpack.c.l.b16 %v2111
        %v2466 = vunpack.c.h.b16 %v2111
        %v2467 = vunpack.c.l.b16 %v2112
        %v2468 = vunpack.c.h.b16 %v2112
        %v2469 = vunpack.c.l.b16 %v2113
        %v2470 = vunpack.c.h.b16 %v2113
        %v2471 = vunpack.c.l.b16 %v2114
        %v2472 = vunpack.c.h.b16 %v2114
        %v2473 = vunpack.c.l.b16 %v2115
        %v2474 = vunpack.c.h.b16 %v2115
        %v2475 = vunpack.c.l.b16 %v2116
        %v2476 = vunpack.c.h.b16 %v2116
        %v2477 = vunpack.c.l.b16 %v2117
        %v2478 = vunpack.c.h.b16 %v2117
        %v2479 = vunpack.c.l.b16 %v2118
        %v2480 = vunpack.c.h.b16 %v2118
        %v2481 = vunpack.c.l.b16 %v2119
        %v2482 = vunpack.c.h.b16 %v2119
        %v2483 = vunpack.c.l.b16 %v2120
        %v2484 = vunpack.c.h.b16 %v2120
        %v2485 = vunpack.c.l.b16 %v2121
        %v2486 = vunpack.c.h.b16 %v2121
        %v2487 = vunpack.c.l.b16 %v2122
        %v2488 = vunpack.c.h.b16 %v2122
        %v2489 = vunpack.c.l.b16 %v2123
        %v2490 = vunpack.c.h.b16 %v2123
        %v2491 = vunpack.c.l.b16 %v2124
        %v2492 = vunpack.c.h.b16 %v2124
        %v2493 = vunpack.c.l.b16 %v2125
        %v2494 = vunpack.c.h.b16 %v2125
        %v2495 = vunpack.c.l.b16 %v2126
        %v2496 = vunpack.c.h.b16 %v2126
        %v2497 = vunpack.c.l.b16 %v2127
        %v2498 = vunpack.c.h.b16 %v2127
        %v2499 = vunpack.c.l.b16 %v2128
        %v2500 = vunpack.c.h.b16 %v2128
        %v2501 = vunpack.c.l.b16 %v2129
        %v2502 = vunpack.c.h.b16 %v2129
        %v2503 = vunpack.c.l.b16 %v2130
        %v2504 = vunpack.c.h.b16 %v2130
        %v2505 = vunpack.c.l.b16 %v2131
        %v2506 = vunpack.c.h.b16 %v2131
        %v2507 = vunpack.c.l.b16 %v2132
        %v2508 = vunpack.c.h.b16 %v2132
        %v2509 = vunpack.c.l.b16 %v2133
        %v2510 = vunpack.c.h.b16 %v2133
        %v2511 = vunpack.c.l.b16 %v2134
        %v2512 = vunpack.c.h.b16 %v2134
        %v2513 = vunpack.c.l.b16 %v2135
        %v2514 = vunpack.c.h.b16 %v2135
        %v2515 = vunpack.c.l.b16 %v2136
        %v2516 = vunpack.c.h.b16 %v2136
        %v2517 = vunpack.c.l.b16 %v2137
        %v2518 = vunpack.c.h.b16 %v2137
        %v2519 = vunpack.c.l.b16 %v2138
        %v2520 = vunpack.c.h.b16 %v2138
        %v2521 = vunpack.c.l.b16 %v2139
        %v2522 = vunpack.c.h.b16 %v2139
        %v2523 = vunpack.c.l.b16 %v2140
        %v2524 = vunpack.c.h.b16 %v2140
        %v2525 = vunpack.c.l.b16 %v2141
        %v2526 = vunpack.c.h.b16 %v2141
        %v2527 = vunpack.c.l.b16 %v2142
        %v2528 = vunpack.c.h.b16 %v2142
        %v2529 = vunpack.c.l.b16 %v2143
        %v2530 = vunpack.c.h.b16 %v2143
        %v2531 = vunpack.c.l.b16 %v2144
        %v2532 = vunpack.c.h.b16 %v2144
        %v2533 = vunpack.c.l.b16 %v2145
        %v2534 = vunpack.c.h.b16 %v2145
        %v2535 = vunpack.c.l.b16 %v2146
        %v2536 = vunpack.c.h.b16 %v2146
        %v2537 = vunpack.c.l.b16 %v2147
        %v2538 = vunpack.c.h.b16 %v2147
        %v2539 = vunpack.c.l.b16 %v2148
        %v2540 = vunpack.c.h.b16 %v2148
        %v2541 = vunpack.c.l.b16 %v2149
        %v2542 = vunpack.c.h.b16 %v2149
        %v2543 = vunpack.c.l.b16 %v2150
        %v2544 = vunpack.c.h.b16 %v2150
        %v2545 = vunpack.c.l.b16 %v2151
        %v2546 = vunpack.c.h.b16 %v2151
        %v2547 = vunpack.c.l.b16 %v2152
        %v2548 = vunpack.c.h.b16 %v2152
        %v2549 = vunpack.c.l.b16 %v2153
        %v2550 = vunpack.c.h.b16 %v2153
        %v2551 = vunpack.c.l.b16 %v2154
        %v2552 = vunpack.c.h.b16 %v2154
        %v2553 = vunpack.c.l.b16 %v2155
        %v2554 = vunpack.c.h.b16 %v2155
        %v2555 = vunpack.c.l.b16 %v2156
        %v2556 = vunpack.c.h.b16 %v2156
        %v2557 = vunpack.c.l.b16 %v2157
        %v2558 = vunpack.c.h.b16 %v2157
        %v2559 = vunpack.c.l.b16 %v2158
        %v2560 = vunpack.c.h.b16 %v2158
        %v2561 = vunpack.c.l.b16 %v2159
        %v2562 = vunpack.c.h.b16 %v2159
        %v2563 = vunpack.c.l.b16 %v2160
        %v2564 = vunpack.c.h.b16 %v2160
        %v2565 = vunpack.c.l.b16 %v2161
        %v2566 = vunpack.c.h.b16 %v2161
        %v2567 = vunpack.c.l.b16 %v2162
        %v2568 = vunpack.c.h.b16 %v2162
        %v2569 = vpack.c.b16 %v2317, %v2313
        %v2570 = vpack.c.b16 %v2318, %v2314
        %v2571 = vpack.c.b16 %v2319, %v2315
        %v2572 = vpack.c.b16 %v2320, %v2316
        %v2573 = vpack.c.b16 %v2325, %v2321
        %v2574 = vpack.c.b16 %v2326, %v2322
        %v2575 = vpack.c.b16 %v2327, %v2323
        %v2576 = vpack.c.b16 %v2328, %v2324
        %v2577 = vpack.c.b16 %v2333, %v2329
        %v2578 = vpack.c.b16 %v2334, %v2330
        %v2579 = vpack.c.b16 %v2335, %v2331
        %v2580 = vpack.c.b16 %v2336, %v2332
        %v2581 = vpack.c.b16 %v2341, %v2337
        %v2582 = vpack.c.b16 %v2342, %v2338
        %v2583 = vpack.c.b16 %v2343, %v2339
        %v2584 = vpack.c.b16 %v2344, %v2340
        %v2585 = vpack.c.b16 %v2349, %v2345
        %v2586 = vpack.c.b16 %v2350, %v2346
        %v2587 = vpack.c.b16 %v2351, %v2347
        %v2588 = vpack.c.b16 %v2352, %v2348
        %v2589 = vpack.c.b16 %v2357, %v2353
        %v2590 = vpack.c.b16 %v2358, %v2354
        %v2591 = vpack.c.b16 %v2359, %v2355
        %v2592 = vpack.c.b16 %v2360, %v2356
        %v2593 = vpack.c.b16 %v2365, %v2361
        %v2594 = vpack.c.b16 %v2366, %v2362
        %v2595 = vpack.c.b16 %v2367, %v2363
        %v2596 = vpack.c.b16 %v2368, %v2364
        %v2597 = vpack.c.b16 %v2373, %v2369
        %v2598 = vpack.c.b16 %v2374, %v2370
        %v2599 = vpack.c.b16 %v2375, %v2371
        %v2600 = vpack.c.b16 %v2376, %v2372
        %v2601 = vpack.c.b16 %v2381, %v2377
        %v2602 = vpack.c.b16 %v2382, %v2378
        %v2603 = vpack.c.b16 %v2383, %v2379
        %v2604 = vpack.c.b16 %v2384, %v2380
        %v2605 = vpack.c.b16 %v2389, %v2385
        %v2606 = vpack.c.b16 %v2390, %v2386
        %v2607 = vpack.c.b16 %v2391, %v2387
        %v2608 = vpack.c.b16 %v2392, %v2388
        %v2609 = vpack.c.b16 %v2397, %v2393
        %v2610 = vpack.c.b16 %v2398, %v2394
        %v2611 = vpack.c.b16 %v2399, %v2395
        %v2612 = vpack.c.b16 %v2400, %v2396
        %v2613 = vpack.c.b16 %v2405, %v2401
        %v2614 = vpack.c.b16 %v2406, %v2402
        %v2615 = vpack.c.b16 %v2407, %v2403
        %v2616 = vpack.c.b16 %v2408, %v2404
        %v2617 = vpack.c.b16 %v2413, %v2409
        %v2618 = vpack.c.b16 %v2414, %v2410
        %v2619 = vpack.c.b16 %v2415, %v2411
        %v2620 = vpack.c.b16 %v2416, %v2412
        %v2621 = vpack.c.b16 %v2421, %v2417
        %v2622 = vpack.c.b16 %v2422, %v2418
        %v2623 = vpack.c.b16 %v2423, %v2419
        %v2624 = vpack.c.b16 %v2424, %v2420
        %v2625 = vpack.c.b16 %v2429, %v2425
        %v2626 = vpack.c.b16 %v2430, %v2426
        %v2627 = vpack.c.b16 %v2431, %v2427
        %v2628 = vpack.c.b16 %v2432, %v2428
        %v2629 = vpack.c.b16 %v2437, %v2433
        %v2630 = vpack.c.b16 %v2438, %v2434
        %v2631 = vpack.c.b16 %v2439, %v2435
        %v2632 = vpack.c.b16 %v2440, %v2436
        %v2633 = vpack.c.b16 %v2445, %v2441
        %v2634 = vpack.c.b16 %v2446, %v2442
        %v2635 = vpack.c.b16 %v2447, %v2443
        %v2636 = vpack.c.b16 %v2448, %v2444
        %v2637 = vpack.c.b16 %v2453, %v2449
        %v2638 = vpack.c.b16 %v2454, %v2450
        %v2639 = vpack.c.b16 %v2455, %v2451
        %v2640 = vpack.c.b16 %v2456, %v2452
        %v2641 = vpack.c.b16 %v2461, %v2457
        %v2642 = vpack.c.b16 %v2462, %v2458
        %v2643 = vpack.c.b16 %v2463, %v2459
        %v2644 = vpack.c.b16 %v2464, %v2460
        %v2645 = vpack.c.b16 %v2469, %v2465
        %v2646 = vpack.c.b16 %v2470, %v2466
        %v2647 = vpack.c.b16 %v2471, %v2467
        %v2648 = vpack.c.b16 %v2472, %v2468
        %v2649 = vpack.c.b16 %v2477, %v2473
        %v2650 = vpack.c.b16 %v2478, %v2474
        %v2651 = vpack.c.b16 %v2479, %v2475
        %v2652 = vpack.c.b16 %v2480, %v2476
        %v2653 = vpack.c.b16 %v2485, %v2481
        %v2654 = vpack.c.b16 %v2486, %v2482
        %v2655 = vpack.c.b16 %v2487, %v2483
        %v2656 = vpack.c.b16 %v2488, %v2484
        %v2657 = vpack.c.b16 %v2493, %v2489
        %v2658 = vpack.c.b16 %v2494, %v2490
        %v2659 = vpack.c.b16 %v2495, %v2491
        %v2660 = vpack.c.b16 %v2496, %v2492
        %v2661 = vpack.c.b16 %v2501, %v2497
        %v2662 = vpack.c.b16 %v2502, %v2498
        %v2663 = vpack.c.b16 %v2503, %v2499
        %v2664 = vpack.c.b16 %v2504, %v2500
        %v2665 = vpack.c.b16 %v2509, %v2505
        %v2666 = vpack.c.b16 %v2510, %v2506
        %v2667 = vpack.c.b16 %v2511, %v2507
        %v2668 = vpack.c.b16 %v2512, %v2508
        %v2669 = vpack.c.b16 %v2517, %v2513
        %v2670 = vpack.c.b16 %v2518, %v2514
        %v2671 = vpack.c.b16 %v2519, %v2515
        %v2672 = vpack.c.b16 %v2520, %v2516
        %v2673 = vpack.c.b16 %v2525, %v2521
        %v2674 = vpack.c.b16 %v2526, %v2522
        %v2675 = vpack.c.b16 %v2527, %v2523
        %v2676 = vpack.c.b16 %v2528, %v2524
        %v2677 = vpack.c.b16 %v2533, %v2529
        %v2678 = vpack.c.b16 %v2534, %v2530
        %v2679 = vpack.c.b16 %v2535, %v2531
        %v2680 = vpack.c.b16 %v2536, %v2532
        %v2681 = vpack.c.b16 %v2541, %v2537
        %v2682 = vpack.c.b16 %v2542, %v2538
        %v2683 = vpack.c.b16 %v2543, %v2539
        %v2684 = vpack.c.b16 %v2544, %v2540
        %v2685 = vpack.c.b16 %v2549, %v2545
        %v2686 = vpack.c.b16 %v2550, %v2546
        %v2687 = vpack.c.b16 %v2551, %v2547
        %v2688 = vpack.c.b16 %v2552, %v2548
        %v2689 = vpack.c.b16 %v2557, %v2553
        %v2690 = vpack.c.b16 %v2558, %v2554
        %v2691 = vpack.c.b16 %v2559, %v2555
        %v2692 = vpack.c.b16 %v2560, %v2556
        %v2693 = vpack.c.b16 %v2565, %v2561
        %v2694 = vpack.c.b16 %v2566, %v2562
        %v2695 = vpack.c.b16 %v2567, %v2563
        %v2696 = vpack.c.b16 %v2568, %v2564
        %2825 = vmatprep.subr.bf16.mxu0 %v2570
        %2826 = vmatpush1.bf16.msra.mxu0 %v2569
        %2827 = vmatprep.subr.bf16.mxu0 %v2574
        %2828 = vmatpush1.bf16.msra.mxu0 %v2573
        %2829 = vmatprep.subr.bf16.mxu0 %v2578
        %2830 = vmatpush1.bf16.msra.mxu0 %v2577
        %2831 = vmatprep.subr.bf16.mxu0 %v2582
        %2832 = vmatpush1.bf16.msra.mxu0 %v2581
        %2833 = vmatprep.subr.bf16.mxu0 %v2586
        %2834 = vmatpush1.bf16.msra.mxu0 %v2585
        %2835 = vmatprep.subr.bf16.mxu0 %v2590
        %2836 = vmatpush1.bf16.msra.mxu0 %v2589
        %2837 = vmatprep.subr.bf16.mxu0 %v2594
        %2838 = vmatpush1.bf16.msra.mxu0 %v2593
        %2839 = vmatprep.subr.bf16.mxu0 %v2598
        %2840 = vmatpush1.bf16.msra.mxu0 %v2597
        %2841 = vmatprep.subr.bf16.mxu0 %v2602
        %2842 = vmatpush1.bf16.msra.mxu0 %v2601
        %2843 = vmatprep.subr.bf16.mxu0 %v2606
        %2844 = vmatpush1.bf16.msra.mxu0 %v2605
        %2845 = vmatprep.subr.bf16.mxu0 %v2610
        %2846 = vmatpush1.bf16.msra.mxu0 %v2609
        %2847 = vmatprep.subr.bf16.mxu0 %v2614
        %2848 = vmatpush1.bf16.msra.mxu0 %v2613
        %2849 = vmatprep.subr.bf16.mxu0 %v2618
        %2850 = vmatpush1.bf16.msra.mxu0 %v2617
        %2851 = vmatprep.subr.bf16.mxu0 %v2622
        %2852 = vmatpush1.bf16.msra.mxu0 %v2621
        %2853 = vmatprep.subr.bf16.mxu0 %v2626
        %2854 = vmatpush1.bf16.msra.mxu0 %v2625
        %2855 = vmatprep.subr.bf16.mxu0 %v2630
        %2856 = vmatpush1.bf16.msra.mxu0 %v2629
        %2857 = vmatprep.mubr.bf16.mxu0 %v2032
        %2858 = vmatmul.mubr.bf16.gmra.mrb[0].mxu0 %v2031
        %v2859 = vpop.f32.mrb[0].mxu0
        %v2860 = vadd.f32 %v2168, %v2859
        %v2861 = vpop.f32.mrb[0].mxu0
        %v2862 = vadd.f32 %v2172, %v2861
        %v2863 = vpop.f32.mrb[0].mxu0
        %v2864 = vadd.f32 %v2168, %v2863
        %v2865 = vpop.f32.mrb[0].mxu0
        %v2866 = vadd.f32 %v2172, %v2865
        %2867 = vdwg.mxu0
        %2868 = vmatprep.subr.bf16.mxu0 %v2634
        %2869 = vmatpush1.bf16.msra.mxu0 %v2633
        %2870 = vmatprep.subr.bf16.mxu0 %v2638
        %2871 = vmatpush1.bf16.msra.mxu0 %v2637
        %2872 = vmatprep.subr.bf16.mxu0 %v2642
        %2873 = vmatpush1.bf16.msra.mxu0 %v2641
        %2874 = vmatprep.subr.bf16.mxu0 %v2646
        %2875 = vmatpush1.bf16.msra.mxu0 %v2645
        %2876 = vmatprep.subr.bf16.mxu0 %v2650
        %2877 = vmatpush1.bf16.msra.mxu0 %v2649
        %2878 = vmatprep.subr.bf16.mxu0 %v2654
        %2879 = vmatpush1.bf16.msra.mxu0 %v2653
        %2880 = vmatprep.subr.bf16.mxu0 %v2658
        %2881 = vmatpush1.bf16.msra.mxu0 %v2657
        %2882 = vmatprep.subr.bf16.mxu0 %v2662
        %2883 = vmatpush1.bf16.msra.mxu0 %v2661
        %2884 = vmatprep.subr.bf16.mxu0 %v2666
        %2885 = vmatpush1.bf16.msra.mxu0 %v2665
        %2886 = vmatprep.subr.bf16.mxu0 %v2670
        %2887 = vmatpush1.bf16.msra.mxu0 %v2669
        %2888 = vmatprep.subr.bf16.mxu0 %v2674
        %2889 = vmatpush1.bf16.msra.mxu0 %v2673
        %2890 = vmatprep.subr.bf16.mxu0 %v2678
        %2891 = vmatpush1.bf16.msra.mxu0 %v2677
        %2892 = vmatprep.subr.bf16.mxu0 %v2682
        %2893 = vmatpush1.bf16.msra.mxu0 %v2681
        %2894 = vmatprep.subr.bf16.mxu0 %v2686
        %2895 = vmatpush1.bf16.msra.mxu0 %v2685
        %2896 = vmatprep.subr.bf16.mxu0 %v2690
        %2897 = vmatpush1.bf16.msra.mxu0 %v2689
        %2898 = vmatprep.subr.bf16.mxu0 %v2694
        %2899 = vmatpush1.bf16.msra.mxu0 %v2693
        %2900 = vmatprep.mubr.bf16.mxu0 %v2034
        %2901 = vmatmul.mubr.bf16.gmra.mrb[0].mxu0 %v2033
        %v2902 = vpop.f32.mrb[0].mxu0
        %v2903 = vadd.f32 %v2860, %v2902
        %v2904 = vpop.f32.mrb[0].mxu0
        %v2905 = vadd.f32 %v2862, %v2904
        %v2906 = vpop.f32.mrb[0].mxu0
        %v2907 = vadd.f32 %v2864, %v2906
        %v2908 = vpop.f32.mrb[0].mxu0
        %v2909 = vadd.f32 %v2866, %v2908
        %2910 = vdwg.mxu0
        %2911 = vmatprep.subr.bf16.mxu0 %v2572
        %2912 = vmatpush1.bf16.msra.mxu0 %v2571
        %2913 = vmatprep.subr.bf16.mxu0 %v2576
        %2914 = vmatpush1.bf16.msra.mxu0 %v2575
        %2915 = vmatprep.subr.bf16.mxu0 %v2580
        %2916 = vmatpush1.bf16.msra.mxu0 %v2579
        %2917 = vmatprep.subr.bf16.mxu0 %v2584
        %2918 = vmatpush1.bf16.msra.mxu0 %v2583
        %2919 = vmatprep.subr.bf16.mxu0 %v2588
        %2920 = vmatpush1.bf16.msra.mxu0 %v2587
        %2921 = vmatprep.subr.bf16.mxu0 %v2592
        %2922 = vmatpush1.bf16.msra.mxu0 %v2591
        %2923 = vmatprep.subr.bf16.mxu0 %v2596
        %2924 = vmatpush1.bf16.msra.mxu0 %v2595
        %2925 = vmatprep.subr.bf16.mxu0 %v2600
        %2926 = vmatpush1.bf16.msra.mxu0 %v2599
        %2927 = vmatprep.subr.bf16.mxu0 %v2604
        %2928 = vmatpush1.bf16.msra.mxu0 %v2603
        %2929 = vmatprep.subr.bf16.mxu0 %v2608
        %2930 = vmatpush1.bf16.msra.mxu0 %v2607
        %2931 = vmatprep.subr.bf16.mxu0 %v2612
        %2932 = vmatpush1.bf16.msra.mxu0 %v2611
        %2933 = vmatprep.subr.bf16.mxu0 %v2616
        %2934 = vmatpush1.bf16.msra.mxu0 %v2615
        %2935 = vmatprep.subr.bf16.mxu0 %v2620
        %2936 = vmatpush1.bf16.msra.mxu0 %v2619
        %2937 = vmatprep.subr.bf16.mxu0 %v2624
        %2938 = vmatpush1.bf16.msra.mxu0 %v2623
        %2939 = vmatprep.subr.bf16.mxu0 %v2628
        %2940 = vmatpush1.bf16.msra.mxu0 %v2627
        %2941 = vmatprep.subr.bf16.mxu0 %v2632
        %2942 = vmatpush1.bf16.msra.mxu0 %v2631
        %2943 = vmatprep.mubr.bf16.mxu0 %v2032
        %2944 = vmatmul.mubr.bf16.gmra.mrb[0].mxu0 %v2031
        %v2945 = vpop.f32.mrb[0].mxu0
        %v2946 = vadd.f32 %v2176, %v2945
        %v2947 = vpop.f32.mrb[0].mxu0
        %v2948 = vadd.f32 %v2180, %v2947
        %v2949 = vpop.f32.mrb[0].mxu0
        %v2950 = vadd.f32 %v2176, %v2949
        %v2951 = vpop.f32.mrb[0].mxu0
        %v2952 = vadd.f32 %v2180, %v2951
        %2953 = vdwg.mxu0
        %2954 = vmatprep.subr.bf16.mxu0 %v2636
        %2955 = vmatpush1.bf16.msra.mxu0 %v2635
        %2956 = vmatprep.subr.bf16.mxu0 %v2640
        %2957 = vmatpush1.bf16.msra.mxu0 %v2639
        %2958 = vmatprep.subr.bf16.mxu0 %v2644
        %2959 = vmatpush1.bf16.msra.mxu0 %v2643
        %2960 = vmatprep.subr.bf16.mxu0 %v2648
        %2961 = vmatpush1.bf16.msra.mxu0 %v2647
        %2962 = vmatprep.subr.bf16.mxu0 %v2652
        %2963 = vmatpush1.bf16.msra.mxu0 %v2651
        %2964 = vmatprep.subr.bf16.mxu0 %v2656
        %2965 = vmatpush1.bf16.msra.mxu0 %v2655
        %2966 = vmatprep.subr.bf16.mxu0 %v2660
        %2967 = vmatpush1.bf16.msra.mxu0 %v2659
        %2968 = vmatprep.subr.bf16.mxu0 %v2664
        %2969 = vmatpush1.bf16.msra.mxu0 %v2663
        %2970 = vmatprep.subr.bf16.mxu0 %v2668
        %2971 = vmatpush1.bf16.msra.mxu0 %v2667
        %2972 = vmatprep.subr.bf16.mxu0 %v2672
        %2973 = vmatpush1.bf16.msra.mxu0 %v2671
        %2974 = vmatprep.subr.bf16.mxu0 %v2676
        %2975 = vmatpush1.bf16.msra.mxu0 %v2675
        %2976 = vmatprep.subr.bf16.mxu0 %v2680
        %2977 = vmatpush1.bf16.msra.mxu0 %v2679
        %2978 = vmatprep.subr.bf16.mxu0 %v2684
        %2979 = vmatpush1.bf16.msra.mxu0 %v2683
        %2980 = vmatprep.subr.bf16.mxu0 %v2688
        %2981 = vmatpush1.bf16.msra.mxu0 %v2687
        %2982 = vmatprep.subr.bf16.mxu0 %v2692
        %2983 = vmatpush1.bf16.msra.mxu0 %v2691
        %2984 = vmatprep.subr.bf16.mxu0 %v2696
        %2985 = vmatpush1.bf16.msra.mxu0 %v2695
        %2986 = vmatprep.mubr.bf16.mxu0 %v2034
        %2987 = vmatmul.mubr.bf16.gmra.mrb[0].mxu0 %v2033
        %v2988 = vpop.f32.mrb[0].mxu0
        %v2989 = vadd.f32 %v2946, %v2988
        %v2990 = vpop.f32.mrb[0].mxu0
        %v2991 = vadd.f32 %v2948, %v2990
        %v2992 = vpop.f32.mrb[0].mxu0
        %v2993 = vadd.f32 %v2950, %v2992
        %v2994 = vpop.f32.mrb[0].mxu0
        %v2995 = vadd.f32 %v2952, %v2994
        %2996 = vdwg.mxu0
        %v2997 = vadd.f32 %v2903, %v1854
        %v2998 = vadd.f32 %v2905, %v1856
        %v2999 = vadd.f32 %v2989, %v1983
        %v3000 = vadd.f32 %v2991, %v1985
        %v3001 = vadd.f32 %v2907, %v1858
        %v3002 = vadd.f32 %v2909, %v1860
        %v3003 = vadd.f32 %v2993, %v1987
        %v3004 = vadd.f32 %v2995, %v1989
        %v3005 = vadd.f32 %v2997, %v2998
        %v3006 = vadd.f32 %v3005, %v2999
        %v3007 = vadd.f32 %v3006, %v3000
        %3008 = vadd.xlane.f32.xlu0 %v3007
        %v3009 = vpop.xlane.xlu0 %3008
        %v3010 = vadd.f32 %v3001, %v3002
        %v3011 = vadd.f32 %v3010, %v3003
        %v3012 = vadd.f32 %v3011, %v3004
        %3013 = vadd.xlane.f32.xlu0 %v3012
        %v3014 = vpop.xlane.xlu0 %3013
        %v3015 = vrcp.pop 512.0
        %v3016 = vmul.f32 %v3009, %v3015
        %v3017 = vmul.f32 %v3014, %v3015
        %v3018 = vsub.f32 %v2997, %v3016
        %v3019 = vsub.f32 %v2998, %v3016
        %v3020 = vsub.f32 %v2999, %v3016
        %v3021 = vsub.f32 %v3000, %v3016
        %v3022 = vsub.f32 %v3001, %v3017
        %v3023 = vsub.f32 %v3002, %v3017
        %v3024 = vsub.f32 %v3003, %v3017
        %v3025 = vsub.f32 %v3004, %v3017
        %v3026 = vmul.f32 %v3018, %v3018
        %v3027 = vmul.f32 %v3019, %v3019
        %v3028 = vmul.f32 %v3020, %v3020
        %v3029 = vmul.f32 %v3021, %v3021
        %v3030 = vmul.f32 %v3022, %v3022
        %v3031 = vmul.f32 %v3023, %v3023
        %v3032 = vmul.f32 %v3024, %v3024
        %v3033 = vmul.f32 %v3025, %v3025
        %v3034 = vadd.f32 %v3026, %v3027
        %v3035 = vadd.f32 %v3034, %v3028
        %v3036 = vadd.f32 %v3035, %v3029
        %3037 = vadd.xlane.f32.xlu0 %v3036
        %v3038 = vpop.xlane.xlu0 %3037
        %v3039 = vadd.f32 %v3030, %v3031
        %v3040 = vadd.f32 %v3039, %v3032
        %v3041 = vadd.f32 %v3040, %v3033
        %3042 = vadd.xlane.f32.xlu0 %v3041
        %v3043 = vpop.xlane.xlu0 %3042
        %v3044 = vmul.f32 %v3038, %v3015
        %v3045 = vmul.f32 %v3043, %v3015
        %v3046 = vadd.f32 %v3044, 1e-05
        %v3047 = vadd.f32 %v3045, 1e-05
        %v3048 = vrsqrt.pop %v3046
        %v3049 = vrsqrt.pop %v3047
        %v3050 = vmul.f32 %v3018, %v3048
        %v3051 = vmul.f32 %v3019, %v3048
        %v3052 = vmul.f32 %v3020, %v3048
        %v3053 = vmul.f32 %v3021, %v3048
        %v3054 = vmul.f32 %v3022, %v3049
        %v3055 = vmul.f32 %v3023, %v3049
        %v3056 = vmul.f32 %v3024, %v3049
        %v3057 = vmul.f32 %v3025, %v3049
        %v3058 = vld [vmem:[%s469] sm:$0xf]
        %v3060 = vlaneseq
        %v3061 = vshrl.u32 %v3060, 7
        %v3062 = vsub.s32 0, %v3061
        %v3063 = vrot.slane %v3058, %v3062
        %v3064 = vlaneseq
        %v3065 = vshrl.u32 %v3064, 7
        %v3066 = vsub.s32 1, %v3065
        %v3067 = vrot.slane %v3058, %v3066
        %v3068 = vlaneseq
        %v3069 = vshrl.u32 %v3068, 7
        %v3070 = vsub.s32 2, %v3069
        %v3071 = vrot.slane %v3058, %v3070
        %v3072 = vlaneseq
        %v3073 = vshrl.u32 %v3072, 7
        %v3074 = vsub.s32 3, %v3073
        %v3075 = vrot.slane %v3058, %v3074
        %v3080 = vmul.f32 %v3050, %v3063
        %v3081 = vmul.f32 %v3051, %v3067
        %v3082 = vmul.f32 %v3052, %v3071
        %v3083 = vmul.f32 %v3053, %v3075
        %v3084 = vmul.f32 %v3054, %v3063
        %v3085 = vmul.f32 %v3055, %v3067
        %v3086 = vmul.f32 %v3056, %v3071
        %v3087 = vmul.f32 %v3057, %v3075
        %v3088 = vld [vmem:[%s478] sm:$0xf]
        %v3090 = vlaneseq
        %v3091 = vshrl.u32 %v3090, 7
        %v3092 = vsub.s32 0, %v3091
        %v3093 = vrot.slane %v3088, %v3092
        %v3094 = vlaneseq
        %v3095 = vshrl.u32 %v3094, 7
        %v3096 = vsub.s32 1, %v3095
        %v3097 = vrot.slane %v3088, %v3096
        %v3098 = vlaneseq
        %v3099 = vshrl.u32 %v3098, 7
        %v3100 = vsub.s32 2, %v3099
        %v3101 = vrot.slane %v3088, %v3100
        %v3102 = vlaneseq
        %v3103 = vshrl.u32 %v3102, 7
        %v3104 = vsub.s32 3, %v3103
        %v3105 = vrot.slane %v3088, %v3104
        %v3110 = vadd.f32 %v3080, %v3093
        %v3111 = vadd.f32 %v3081, %v3097
        %v3112 = vadd.f32 %v3082, %v3101
        %v3113 = vadd.f32 %v3083, %v3105
        %v3114 = vadd.f32 %v3084, %v3093
        %v3115 = vadd.f32 %v3085, %v3097
        %v3116 = vadd.f32 %v3086, %v3101
        %v3117 = vadd.f32 %v3087, %v3105
        %3118 = vst [vmem:[%s538] sm:$0xff] %v3110
        %3119 = vst [vmem:[%s538 + $0x8] sm:$0xff] %v3111
        %3120 = vst [vmem:[%s538 + $0x10] sm:$0xff] %v3112
        %3121 = vst [vmem:[%s538 + $0x18] sm:$0xff] %v3113
        %3122 = vst [vmem:[%s538 + $0x20] sm:$0xff] %v3114
        %3123 = vst [vmem:[%s538 + $0x28] sm:$0xff] %v3115
        %3124 = vst [vmem:[%s538 + $0x30] sm:$0xff] %v3116
        %3125 = vst [vmem:[%s538 + $0x38] sm:$0xff] %v3117
        %s3126 = sand.u32 %s239, 1
        %s3127 = scalar_lea.sflag [#allocation4], %s3126
        %s3128 = sand.u32 %s239, 1
        %s3129 = smul.addr %s3128, 64
        %s3130 = scalar_lea.vmem [#allocation14], %s3129
        // Predicated region
        $region77: #{tpu_custom_call.1} parent=47 // pred_check
          %p3131 = pneg %p249
        $region78: #{tpu_custom_call.1} parent=47 // pred_check_branch
          %3133 = sbr.rel (%p3131) target = $region80
        $region79: #{tpu_custom_call.1} parent=47 // pred_region
          %s3134 = smul.u32 2, %s38
          %s3136 = ssub.s32 1024, 1024
          %3137 = vsyncadd %s3127, %s3136
          %s3138 = smul.addr %s3134, 4
          %s3139 = smul.addr %s37, 16
          %s3140 = sadd.s32 %s3138, %s3139
          %s3141 = smul.addr %s3140, 128
          %s3142 = scalar_lea.hbm %s7, %s3141
          %s3143 = sshll.u32 %s3130, 4
          %s3144 = int_to_ptr.vmem [resolvable:$true] %s3143
          %3149 = dma.vmem_to_hbm [thread:$0]  %s3144, 1024, %s3142, %s3127, 512, 512, 32
        $region80: #{tpu_custom_call.1} parent=47 // pred_fallthru
          _
      $region48: #{tpu_custom_call.1} parent=5 // pred_fallthru
        _
      %p3150 = scmp.le.s32.totalorder 2, %s28
      // Predicated region
      $region81: #{tpu_custom_call.1} parent=5 // pred_check
        %p3151 = pneg %p3150
      $region82: #{tpu_custom_call.1} parent=5 // pred_check_branch
        %3153 = sbr.rel (%p3151) target = $region84
      $region83: #{tpu_custom_call.1} parent=5 // pred_region
        %s3154 = ssub.s32 %s28, 2
        // Predicated region
        $region85: #{tpu_custom_call.1} parent=83 // pred_check
          %p3155 = pneg %p255
        $region86: #{tpu_custom_call.1} parent=83 // pred_check_branch
          %3157 = sbr.rel (%p3155) target = $region88
        $region87: #{tpu_custom_call.1} parent=83 // pred_region
          %s3158 = sand.u32 %s240, 1
          %s3159 = scalar_lea.sflag [#allocation4], %s3158
          %s3160 = sand.u32 %s240, 1
          %s3161 = smul.addr %s3160, 64
          %s3162 = scalar_lea.vmem [#allocation14], %s3161
          %3163 = dma.done %s3159, 1024
        $region88: #{tpu_custom_call.1} parent=83 // pred_fallthru
          _
      $region84: #{tpu_custom_call.1} parent=5 // pred_fallthru
        _
    $region6: #{tpu_custom_call.1} parent=1 // loop_footer
      %s32 = sadd.s32 1, %s28
    $region7: #{tpu_custom_call.1} parent=1 // loop_footer_branch
      %27 = sbr.rel target = $region3
    $region8: #{tpu_custom_call.1} parent=1 // loop_exit
      _
    %3164 = vsyncpa [#allocation3], 1
    %s3165 = scalar_lea.sflag [#allocation3], 1
    %3166 = vsyncpa %s3165, 1
    %3167 = vsyncpa [#allocation6], 1
    %s3168 = scalar_lea.sflag [#allocation6], 1
    %3169 = vsyncpa %s3168, 1
    %3170 = vsyncpa [#allocation9], 1
    %s3171 = scalar_lea.sflag [#allocation9], 1
    %3172 = vsyncpa %s3171, 1
    %3173 = vsyncpa [#allocation12], 1
    %s3174 = scalar_lea.sflag [#allocation12], 1
    %3175 = vsyncpa %s3174, 1
    %3176 = vsyncpa [#allocation4], 1
    %s3177 = scalar_lea.sflag [#allocation4], 1
    %3178 = vsyncpa %s3177, 1

</llo_original>
